<compile_context>
chip_gen: v5e
topology: v5e:2x2
jax: 0.10.0
libtpu: 0.0.40
codegen_flags: <defaults>
</compile_context>

<pallas_src>
import functools

import jax
import jax.numpy as jnp
from jax import lax
from jax.experimental import pallas as pl
from jax.experimental.pallas import tpu as pltpu

# The depthwise interior lives at sublane (column) offset _LP inside the hid
# scratch so its store is 8/16-aligned; columns _LP-1 and _LP+W hold the zero
# padding read by the kw=0 / kw=2 taps.  Columns [0, _LP-1) are never read.
_LP = 16


# ---------------------------------------------------------------------------
# Fused kernel: one grid step = one batch element x one tile of output rows.
# ---------------------------------------------------------------------------

def _fused_ir_kernel(*refs, H, W, Wo, Cin, Chid, Cout, stride, tile_oh,
                     n_row_tiles, pad_bottom, expand, use_res, hid_dtype,
                     chid_block):
    it = iter(refs)
    x_ref = next(it)
    if expand:
        w_exp_ref = next(it)
        b1_ref = next(it)
    w_dw_ref = next(it)
    b2_ref = next(it)
    w_pj_ref = next(it)
    b3_ref = next(it)
    o_ref = next(it)
    hid_ref = next(it)
    if stride == 2:
        even_ref = next(it)
        odd_ref = next(it)

    tile_ih = (tile_oh - 1) * stride + 3
    t = pl.program_id(1)
    o0 = pl.multiple_of(t * tile_oh, tile_oh)   # first output row of this tile
    i_base = o0 * stride - 1                    # first padded-window input row

    # Zero-pad columns read by the kw=0 / kw=2 taps (tiny writes).
    zcol = jnp.zeros((tile_ih, 1, Chid), hid_dtype)
    hid_ref[:, _LP - 1:_LP, :] = zcol
    hid_ref[:, _LP + W:_LP + W + 1, :] = zcol

    def stage(v_lo, v_hi):
        """Expand (1x1 + bias + ReLU6) and write the padded depthwise window.

        v_lo / v_hi (static ints in {0, 1}) = number of zero halo rows at the
        top / bottom of this tile's window.  Interior tiles use v_lo=v_hi=0 and
        reduce to one contiguous slice + one matmul, no masking."""
        n_valid = tile_ih - v_lo - v_hi
        g0 = i_base + v_lo                       # >= 0 by construction
        xs = x_ref[0, pl.ds(g0, n_valid), :, :]  # (n_valid, W, Cin) f32
        if expand:
            a = xs.reshape(n_valid * W, Cin).astype(jnp.bfloat16)
            h = jnp.dot(a, w_exp_ref[...], preferred_element_type=jnp.float32)
            h = jnp.clip(h + b1_ref[...], 0.0, 6.0)     # folded-BN bias + ReLU6
            interior = h.reshape(n_valid, W, Chid)
        else:
            interior = xs
        if v_lo:
            hid_ref[0:v_lo, _LP - 1:_LP + W + 1, :] = jnp.zeros(
                (v_lo, W + 2, Chid), hid_dtype)
        if v_hi:
            hid_ref[tile_ih - v_hi:tile_ih, _LP - 1:_LP + W + 1, :] = jnp.zeros(
                (v_hi, W + 2, Chid), hid_dtype)
        hid_ref[v_lo:v_lo + n_valid, _LP:_LP + W, :] = interior.astype(hid_dtype)

    if n_row_tiles == 1:
        stage(1, pad_bottom)
    else:
        @pl.when(t == 0)
        def _top():
            stage(1, 0)

        if pad_bottom:
            if n_row_tiles > 2:
                @pl.when(jnp.logical_and(t > 0, t < n_row_tiles - 1))
                def _mid():
                    stage(0, 0)

            @pl.when(t == n_row_tiles - 1)
            def _bot():
                stage(0, pad_bottom)
        else:
            @pl.when(t > 0)
            def _rest():
                stage(0, 0)

    # stride=2: deinterleave the padded window into even/odd column planes once
    # (2 strided reads) so the 9 taps below are unit-stride along W.
    if stride == 2:
        even_ref[...] = hid_ref[:, pl.ds(_LP - 1, Wo + 1, 2), :]
        odd_ref[...] = hid_ref[:, pl.ds(_LP, Wo, 2), :]

    def tap(kh, kw, c0, c1):
        if stride == 1:
            s = _LP - 1 + kw
            return hid_ref[kh:kh + tile_oh, s:s + Wo, c0:c1]
        rows = pl.ds(kh, tile_oh, 2)
        if kw == 0:
            return even_ref[rows, 0:Wo, c0:c1]
        if kw == 1:
            return odd_ref[rows, 0:Wo, c0:c1]
        return even_ref[rows, 1:Wo + 1, c0:c1]

    # 3x3 depthwise (+ folded-BN bias + ReLU6) and the 1x1 projection, blocked
    # over Chid so the f32 accumulator stays well inside the 64-vreg file.
    y = jnp.zeros((tile_oh * Wo, Cout), jnp.float32)
    for c0 in range(0, Chid, chid_block):
        c1 = min(Chid, c0 + chid_block)
        cw = c1 - c0
        acc = jnp.zeros((tile_oh, Wo, cw), jnp.float32)
        for kh in range(3):
            for kw in range(3):
                acc = acc + tap(kh, kw, c0, c1) * w_dw_ref[kh, kw:kw + 1, c0:c1]
        a2 = jnp.clip(acc + b2_ref[0:1, c0:c1], 0.0, 6.0)
        a2 = a2.reshape(tile_oh * Wo, cw).astype(jnp.bfloat16)
        y = y + jnp.dot(a2, w_pj_ref[c0:c1, :],
                        preferred_element_type=jnp.float32)
    y = y + b3_ref[...]

    if use_res:                                  # stride == 1 and Cin == Cout
        res = x_ref[0, pl.ds(o0, tile_oh), :, :]
        y = y + res.reshape(tile_oh * Wo, Cout)

    o_ref[0] = y.reshape(tile_oh, Wo, Cout).astype(o_ref.dtype)


# ---------------------------------------------------------------------------
# Wrapper
# ---------------------------------------------------------------------------

def _rup(x, m):
    return (x + m - 1) // m * m


def _padded_bytes(shape, dtype):
    """Approximate VMEM footprint of a block with (sublane, lane) tiling."""
    item = jnp.dtype(dtype).itemsize
    sub = {4: 8, 2: 16, 1: 32}.get(item, 8)
    lead = 1
    for d in shape[:-2]:
        lead *= d
    return lead * _rup(shape[-2], sub) * _rup(shape[-1], 128) * item


def _vmem_estimate(H, W, Wo, Cin, Chid, Cout, tile_oh, stride, hid_dtype):
    tile_ih = (tile_oh - 1) * stride + 3
    total = 2 * _padded_bytes((1, H, W, Cin), jnp.float32)            # image block (dbl buf)
    total += 2 * _padded_bytes((1, tile_oh, Wo, Cout), jnp.float32)   # output block (dbl buf)
    total += _padded_bytes((tile_ih, _LP + W + 1, Chid), hid_dtype)   # hid scratch
    if stride == 2:
        total += _padded_bytes((tile_ih, Wo + 1, Chid), hid_dtype)
        total += _padded_bytes((tile_ih, Wo, Chid), hid_dtype)
    return total + (2 << 20)                                          # weights + slack


def _tpu_generation():
    try:
        kind = jax.devices()[0].device_kind.lower()
    except Exception:
        return 0
    for g in (7, 6, 5, 4):
        if "v{}".format(g) in kind:
            return g
    return 0


def inverted_residual_fused(x_nhwc, params, *, stride, expand, use_res,
                            hid_dtype=jnp.float32, row_tile=None,
                            chid_block=256):
    """Fused InvertedResidual forward on an NHWC input."""
    assert stride in (1, 2)
    N, H, W, Cin = x_nhwc.shape
    Chid = params["w_dw"].shape[-1]
    Cout = params["w_proj"].shape[-1]
    if not expand:
        assert Chid == Cin
    Ho = (H - 1) // stride + 1
    Wo = (W - 1) // stride + 1
    pad_bottom = max(0, (Ho - 1) * stride + 2 - H)      # 0 or 1 zero rows at the bottom

    gen = _tpu_generation()
    # v7x halves VMEM (64 MiB / TensorCore) -> tighter explicit scoped budget.
    vmem_limit = (40 << 20) if gen >= 7 else (80 << 20)
    budget = int(0.6 * vmem_limit)

    # Row tile: prefer the whole image (fewest grid steps, no halo recompute),
    # subject to (a) the VMEM estimate and (b) keeping the f32 depthwise
    # accumulator within ~16 vregs of the 64-vreg file.
    lane_tiles = -(-min(Chid, chid_block) // 128)
    sub_tiles = -(-Wo // 8)
    if row_tile is None:
        tile_oh = 1
        for cand in range(Ho, 0, -1):
            if Ho % cand:
                continue
            if cand * sub_tiles * lane_tiles > 16:
                continue
            if _vmem_estimate(H, W, Wo, Cin, Chid, Cout, cand, stride,
                              hid_dtype) > budget:
                continue
            tile_oh = cand
            break
    else:
        assert Ho % row_tile == 0, "row_tile must divide the output height"
        tile_oh = row_tile
    tile_ih = (tile_oh - 1) * stride + 3
    n_row_tiles = Ho // tile_oh

    kernel = functools.partial(
        _fused_ir_kernel, H=H, W=W, Wo=Wo, Cin=Cin, Chid=Chid, Cout=Cout,
        stride=stride, tile_oh=tile_oh, n_row_tiles=n_row_tiles,
        pad_bottom=pad_bottom, expand=expand, use_res=use_res,
        hid_dtype=hid_dtype, chid_block=chid_block)

    # Per-image input block: its index map ignores t, so it is DMA'd once per
    # image and stays resident across all row tiles of that image.
    in_specs = [pl.BlockSpec((1, H, W, Cin), lambda n, t: (n, 0, 0, 0))]
    args = [x_nhwc]
    if expand:
        in_specs += [pl.BlockSpec((Cin, Chid), lambda n, t: (0, 0)),
                     pl.BlockSpec((1, Chid), lambda n, t: (0, 0))]
        args += [params["w_exp"], params["b1"]]
    in_specs += [pl.BlockSpec((3, 3, Chid), lambda n, t: (0, 0, 0)),
                 pl.BlockSpec((1, Chid), lambda n, t: (0, 0)),
                 pl.BlockSpec((Chid, Cout), lambda n, t: (0, 0)),
                 pl.BlockSpec((1, Cout), lambda n, t: (0, 0))]
    args += [params["w_dw"], params["b2"], params["w_proj"], params["b3"]]

    scratch = [pltpu.VMEM((tile_ih, _LP + W + 1, Chid), hid_dtype)]
    if stride == 2:
        scratch += [pltpu.VMEM((tile_ih, Wo + 1, Chid), hid_dtype),
                    pltpu.VMEM((tile_ih, Wo, Chid), hid_dtype)]

    def call(dim_semantics):
        return pl.pallas_call(
            kernel,
            out_shape=jax.ShapeDtypeStruct((N, Ho, Wo, Cout), x_nhwc.dtype),
            grid=(N, n_row_tiles),
            in_specs=in_specs,
            out_specs=pl.BlockSpec((1, tile_oh, Wo, Cout),
                                   lambda n, t: (n, t, 0, 0)),
            scratch_shapes=scratch,
            compiler_params=pltpu.CompilerParams(
                dimension_semantics=dim_semantics,
                vmem_limit_bytes=vmem_limit),
        )(*args)

    if gen >= 7:
        # v7x: 2 TensorCores per chip -- shard the batch axis across the cores.
        try:
            return jax.block_until_ready(
                call((pltpu.CORE_PARALLEL, pltpu.ARBITRARY)))
        except Exception:
            pass  # conservative fallback (identical numerics) below
    return call(("parallel", "parallel"))


# ---------------------------------------------------------------------------
# Module (parameters + forward) and pure-JAX reference
# ---------------------------------------------------------------------------

def _fold_bn(c, idx, eps=1e-5):
    """Deterministic BatchNorm parameters folded to (scale, bias)."""
    i = jnp.arange(c, dtype=jnp.float32)
    gamma = 1.0 + 0.01 * (i + idx)
    beta = 0.02 * (i - idx)
    mean = 0.01 * (i + 2.0 * idx)
    var = 1.0 + 0.03 * (i + idx)
    scale = gamma / jnp.sqrt(var + eps)
    bias = beta - mean * scale
    return scale, bias


class InvertedResidualPallas:
    """MobileNetV2 InvertedResidual with inference (folded) BatchNorm."""

    def __init__(self, inp, oup, stride, expand_ratio, key):
        assert stride in (1, 2)
        self.inp, self.oup, self.stride = inp, oup, stride
        self.expand = not (abs(expand_ratio - 1) < 0.01)
        self.use_res_connect = (stride == 1 and inp == oup)
        hidden = int(round(inp * expand_ratio))
        self.hidden = hidden
        # Review item (v6e/v7x): flip to jnp.bfloat16 to hold the expanded
        # window in bf16; kept f32 here (see TODO at the top of the file).
        self.hid_dtype = jnp.float32

        k1, k2, k3 = jax.random.split(key, 3)
        w_dw = jax.random.normal(k2, (3, 3, hidden), jnp.float32) * (1.0 / 3.0)
        s2, b2 = _fold_bn(hidden, 2)
        w_pj = jax.random.normal(k3, (hidden, oup), jnp.float32) / jnp.sqrt(float(hidden))
        s3, b3 = _fold_bn(oup, 3)

        # Fold BN scales into the conv weights (one-time constant transform)
        # and pre-cast the MXU operands to bf16 so the kernel never converts
        # weights; only the bias adds remain in-kernel.
        self.params = {
            "w_dw": w_dw * s2.reshape(1, 1, -1),
            "b2": b2.reshape(1, -1),
            "w_proj": (w_pj * s3.reshape(1, -1)).astype(jnp.bfloat16),
            "b3": b3.reshape(1, -1),
        }
        if self.expand:
            w_exp = jax.random.normal(k1, (inp, hidden), jnp.float32) / jnp.sqrt(float(inp))
            s1, b1 = _fold_bn(hidden, 1)
            self.params["w_exp"] = (w_exp * s1.reshape(1, -1)).astype(jnp.bfloat16)
            self.params["b1"] = b1.reshape(1, -1)

    def __call__(self, x_nchw, row_tile=None):
        x = jnp.transpose(x_nchw, (0, 2, 3, 1))     # NCHW -> NHWC (channels on lanes)
        out = inverted_residual_fused(
            x, self.params, stride=self.stride, expand=self.expand,
            use_res=self.use_res_connect, hid_dtype=self.hid_dtype,
            row_tile=row_tile)
        return jnp.transpose(out, (0, 3, 1, 2))     # NHWC -> NCHW

    def reference(self, x_nchw):
        """Pure-JAX reference mirroring the kernel's folded-BN / bf16-MXU
        precision policy (tight correctness check)."""
        p = self.params
        x = jnp.transpose(x_nchw, (0, 2, 3, 1))
        h = x
        if self.expand:
            h = jnp.einsum("nhwc,cd->nhwd", h.astype(jnp.bfloat16), p["w_exp"],
                           preferred_element_type=jnp.float32)
            h = jnp.clip(h + p["b1"], 0.0, 6.0)
        h = h.astype(self.hid_dtype).astype(jnp.float32)
        C = self.hidden
        h = lax.conv_general_dilated(
            h, p["w_dw"].reshape(3, 3, 1, C),
            window_strides=(self.stride, self.stride),
            padding=((1, 1), (1, 1)),
            dimension_numbers=("NHWC", "HWIO", "NHWC"),
            feature_group_count=C)
        h = jnp.clip(h + p["b2"], 0.0, 6.0)
        o = jnp.einsum("nhwc,cd->nhwd", h.astype(jnp.bfloat16), p["w_proj"],
                       preferred_element_type=jnp.float32)
        o = o + p["b3"]
        if self.use_res_connect:
            o = o + x
        return jnp.transpose(o, (0, 3, 1, 2))


# ---------------------------------------------------------------------------

if __name__ == "__main__":
    key = jax.random.PRNGKey(0)
    N, H, W = 2, 16, 16
    cases = [
        (8, 8, 1, 6),    # expand x6 + residual           (stride 1)
        (8, 16, 2, 6),   # expand x6 + stride-2 downsample
        (8, 8, 1, 1),    # expand_ratio == 1 (no expand) + residual
    ]
    for idx, (inp, oup, stride, er) in enumerate(cases):
        key, kx, kp = jax.random.split(key, 3)
        x = jax.random.normal(kx, (N, inp, H, W), jnp.float32)
        block = InvertedResidualPallas(inp, oup, stride, er, kp)
        ref = jax.block_until_ready(block.reference(x))
        Ho = (H - 1) // stride + 1
        Wo = (W - 1) // stride + 1
        # Run with the auto-chosen row tile and with a forced smaller tile so
        # the pl.when first / interior / last boundary paths are all exercised.
        for row_tile in (None, 4):
            out = jax.block_until_ready(block(x, row_tile=row_tile))
            assert out.shape == (N, oup, Ho, Wo), (idx, row_tile, out.shape)
            err = float(jnp.max(jnp.abs(out - ref)))
            assert jnp.allclose(out, ref, rtol=1e-3, atol=1e-3), (idx, row_tile, err)
    print("KERNEL_OK")
</pallas_src>

<mosaic_0001>
module attributes {stable_mosaic.version = 11 : i64} {
  func.func @_fused_ir_kernel(%arg0: i32, %arg1: i32, %arg2: memref<1x16x16x8xf32, #tpu.memory_space<vmem>>, %arg3: memref<8x48xbf16, #tpu.memory_space<vmem>>, %arg4: memref<1x48xf32, #tpu.memory_space<vmem>>, %arg5: memref<3x3x48xf32, #tpu.memory_space<vmem>>, %arg6: memref<1x48xf32, #tpu.memory_space<vmem>>, %arg7: memref<48x8xbf16, #tpu.memory_space<vmem>>, %arg8: memref<1x8xf32, #tpu.memory_space<vmem>>, %arg9: memref<1x8x16x8xf32, #tpu.memory_space<vmem>>, %arg10: memref<10x33x48xf32, #tpu.memory_space<vmem>>) attributes {dimension_semantics = [#tpu.dimension_semantics<parallel>, #tpu.dimension_semantics<parallel>], iteration_bounds = array<i64: 2, 2>, scalar_prefetch = 0 : i64, scratch_operands = 1 : i64, tpu.core_type = #tpu.core_type<tc>, window_params = [{transform_indices = @transform_0, window_bounds = array<i64: 1, 16, 16, 8>}, {pipeline_mode = #tpu.pipeline_mode<synchronous>, transform_indices = @transform_1, window_bounds = array<i64: 8, 48>}, {pipeline_mode = #tpu.pipeline_mode<synchronous>, transform_indices = @transform_2, window_bounds = array<i64: 1, 48>}, {pipeline_mode = #tpu.pipeline_mode<synchronous>, transform_indices = @transform_3, window_bounds = array<i64: 3, 3, 48>}, {pipeline_mode = #tpu.pipeline_mode<synchronous>, transform_indices = @transform_4, window_bounds = array<i64: 1, 48>}, {pipeline_mode = #tpu.pipeline_mode<synchronous>, transform_indices = @transform_5, window_bounds = array<i64: 48, 8>}, {pipeline_mode = #tpu.pipeline_mode<synchronous>, transform_indices = @transform_6, window_bounds = array<i64: 1, 8>}, {transform_indices = @transform_7, window_bounds = array<i64: 1, 8, 16, 8>}]} {
    %c8_i32 = arith.constant 8 : i32
    %0 = arith.muli %arg1, %c8_i32 : i32
    %1 = tpu.assume_multiple %0, 8 : i32
    %c1_i32 = arith.constant 1 : i32
    %2 = arith.muli %1, %c1_i32 : i32
    %c1_i32_0 = arith.constant 1 : i32
    %3 = arith.subi %2, %c1_i32_0 : i32
    %cst = arith.constant 0.000000e+00 : f32
    %4 = vector.broadcast %cst : f32 to vector<10x1x48xf32>
    %c0 = arith.constant 0 : index
    %c15 = arith.constant 15 : index
    %c0_1 = arith.constant 0 : index
    %5 = vector.load %arg10[%c0, %c15, %c0_1] : memref<10x33x48xf32, #tpu.memory_space<vmem>>, vector<10x1x48xf32>
    tpu.vector_store %arg10[%c0, %c15, %c0_1], %4 {strides = array<i32>} : memref<10x33x48xf32, #tpu.memory_space<vmem>>, vector<10x1x48xf32>,
    %c0_2 = arith.constant 0 : index
    %c32 = arith.constant 32 : index
    %c0_3 = arith.constant 0 : index
    %6 = vector.load %arg10[%c0_2, %c32, %c0_3] : memref<10x33x48xf32, #tpu.memory_space<vmem>>, vector<10x1x48xf32>
    tpu.vector_store %arg10[%c0_2, %c32, %c0_3], %4 {strides = array<i32>} : memref<10x33x48xf32, #tpu.memory_space<vmem>>, vector<10x1x48xf32>,
    %c0_i32 = arith.constant 0 : i32
    %7 = arith.cmpi eq, %arg1, %c0_i32 : i32
    %8 = arith.extui %7 : i1 to i32
    %c0_i32_4 = arith.constant 0 : i32
    %9 = arith.cmpi ne, %8, %c0_i32_4 : i32
    scf.if %9 {
      %c1_i32_75 = arith.constant 1 : i32
      %103 = arith.addi %3, %c1_i32_75 : i32
      %c0_76 = arith.constant 0 : index
      %104 = arith.index_cast %103 : i32 to index
      %c0_77 = arith.constant 0 : index
      %c0_78 = arith.constant 0 : index
      %105 = vector.load %arg2[%c0_76, %104, %c0_77, %c0_78] : memref<1x16x16x8xf32, #tpu.memory_space<vmem>>, vector<1x9x16x8xf32>
      %106 = vector.shape_cast %105 : vector<1x9x16x8xf32> to vector<9x16x8xf32>
      %107 = vector.shape_cast %106 : vector<9x16x8xf32> to vector<144x8xf32>
      %108 = arith.truncf %107 : vector<144x8xf32> to vector<144x8xbf16>
      %c0_79 = arith.constant 0 : index
      %c0_80 = arith.constant 0 : index
      %109 = vector.load %arg3[%c0_79, %c0_80] : memref<8x48xbf16, #tpu.memory_space<vmem>>, vector<8x48xbf16>
      %cst_81 = arith.constant dense<0.000000e+00> : vector<144x48xf32>
      %110 = tpu.matmul %108, %109, %cst_81 {dimension_numbers = #tpu.dot_dimension_numbers<[1], [0], [0], [1], [0, 0, 1, 1], [], []>} : vector<144x8xbf16>, vector<8x48xbf16>, vector<144x48xf32> -> vector<144x48xf32>
      %c0_82 = arith.constant 0 : index
      %c0_83 = arith.constant 0 : index
      %111 = vector.load %arg4[%c0_82, %c0_83] : memref<1x48xf32, #tpu.memory_space<vmem>>, vector<1x48xf32>
      %112 = vector.broadcast %111 : vector<1x48xf32> to vector<144x48xf32>
      %113 = arith.addf %110, %112 : vector<144x48xf32>
      %cst_84 = arith.constant 0.000000e+00 : f32
      %cst_85 = arith.constant 6.000000e+00 : f32
      %114 = vector.broadcast %cst_84 : f32 to vector<144x48xf32>
      %115 = arith.maximumf %114, %113 : vector<144x48xf32>
      %116 = vector.broadcast %cst_85 : f32 to vector<144x48xf32>
      %117 = arith.minimumf %116, %115 : vector<144x48xf32>
      %118 = vector.shape_cast %117 : vector<144x48xf32> to vector<9x16x48xf32>
      %cst_86 = arith.constant 0.000000e+00 : f32
      %119 = vector.broadcast %cst_86 : f32 to vector<1x18x48xf32>
      %c0_87 = arith.constant 0 : index
      %c15_88 = arith.constant 15 : index
      %c0_89 = arith.constant 0 : index
      %120 = vector.load %arg10[%c0_87, %c15_88, %c0_89] : memref<10x33x48xf32, #tpu.memory_space<vmem>>, vector<1x18x48xf32>
      tpu.vector_store %arg10[%c0_87, %c15_88, %c0_89], %119 {strides = array<i32>} : memref<10x33x48xf32, #tpu.memory_space<vmem>>, vector<1x18x48xf32>,
      %c1_90 = arith.constant 1 : index
      %c16_91 = arith.constant 16 : index
      %c0_92 = arith.constant 0 : index
      %121 = vector.load %arg10[%c1_90, %c16_91, %c0_92] : memref<10x33x48xf32, #tpu.memory_space<vmem>>, vector<9x16x48xf32>
      tpu.vector_store %arg10[%c1_90, %c16_91, %c0_92], %118 {strides = array<i32>} : memref<10x33x48xf32, #tpu.memory_space<vmem>>, vector<9x16x48xf32>,
    } else {
    }
    %c1_i32_5 = arith.constant 1 : i32
    %10 = arith.cmpi eq, %arg1, %c1_i32_5 : i32
    %11 = arith.extui %10 : i1 to i32
    %c0_i32_6 = arith.constant 0 : i32
    %12 = arith.cmpi ne, %11, %c0_i32_6 : i32
    scf.if %12 {
      %c0_i32_75 = arith.constant 0 : i32
      %103 = arith.addi %3, %c0_i32_75 : i32
      %c0_76 = arith.constant 0 : index
      %104 = arith.index_cast %103 : i32 to index
      %c0_77 = arith.constant 0 : index
      %c0_78 = arith.constant 0 : index
      %105 = vector.load %arg2[%c0_76, %104, %c0_77, %c0_78] : memref<1x16x16x8xf32, #tpu.memory_space<vmem>>, vector<1x9x16x8xf32>
      %106 = vector.shape_cast %105 : vector<1x9x16x8xf32> to vector<9x16x8xf32>
      %107 = vector.shape_cast %106 : vector<9x16x8xf32> to vector<144x8xf32>
      %108 = arith.truncf %107 : vector<144x8xf32> to vector<144x8xbf16>
      %c0_79 = arith.constant 0 : index
      %c0_80 = arith.constant 0 : index
      %109 = vector.load %arg3[%c0_79, %c0_80] : memref<8x48xbf16, #tpu.memory_space<vmem>>, vector<8x48xbf16>
      %cst_81 = arith.constant dense<0.000000e+00> : vector<144x48xf32>
      %110 = tpu.matmul %108, %109, %cst_81 {dimension_numbers = #tpu.dot_dimension_numbers<[1], [0], [0], [1], [0, 0, 1, 1], [], []>} : vector<144x8xbf16>, vector<8x48xbf16>, vector<144x48xf32> -> vector<144x48xf32>
      %c0_82 = arith.constant 0 : index
      %c0_83 = arith.constant 0 : index
      %111 = vector.load %arg4[%c0_82, %c0_83] : memref<1x48xf32, #tpu.memory_space<vmem>>, vector<1x48xf32>
      %112 = vector.broadcast %111 : vector<1x48xf32> to vector<144x48xf32>
      %113 = arith.addf %110, %112 : vector<144x48xf32>
      %cst_84 = arith.constant 0.000000e+00 : f32
      %cst_85 = arith.constant 6.000000e+00 : f32
      %114 = vector.broadcast %cst_84 : f32 to vector<144x48xf32>
      %115 = arith.maximumf %114, %113 : vector<144x48xf32>
      %116 = vector.broadcast %cst_85 : f32 to vector<144x48xf32>
      %117 = arith.minimumf %116, %115 : vector<144x48xf32>
      %118 = vector.shape_cast %117 : vector<144x48xf32> to vector<9x16x48xf32>
      %cst_86 = arith.constant 0.000000e+00 : f32
      %119 = vector.broadcast %cst_86 : f32 to vector<1x18x48xf32>
      %c9 = arith.constant 9 : index
      %c15_87 = arith.constant 15 : index
      %c0_88 = arith.constant 0 : index
      %120 = vector.load %arg10[%c9, %c15_87, %c0_88] : memref<10x33x48xf32, #tpu.memory_space<vmem>>, vector<1x18x48xf32>
      tpu.vector_store %arg10[%c9, %c15_87, %c0_88], %119 {strides = array<i32>} : memref<10x33x48xf32, #tpu.memory_space<vmem>>, vector<1x18x48xf32>,
      %c0_89 = arith.constant 0 : index
      %c16_90 = arith.constant 16 : index
      %c0_91 = arith.constant 0 : index
      %121 = vector.load %arg10[%c0_89, %c16_90, %c0_91] : memref<10x33x48xf32, #tpu.memory_space<vmem>>, vector<9x16x48xf32>
      tpu.vector_store %arg10[%c0_89, %c16_90, %c0_91], %118 {strides = array<i32>} : memref<10x33x48xf32, #tpu.memory_space<vmem>>, vector<9x16x48xf32>,
    } else {
    }
    %cst_7 = arith.constant 0.000000e+00 : f32
    %13 = vector.broadcast %cst_7 : f32 to vector<128x8xf32>
    %cst_8 = arith.constant 0.000000e+00 : f32
    %14 = vector.broadcast %cst_8 : f32 to vector<8x16x48xf32>
    %c0_9 = arith.constant 0 : index
    %c15_10 = arith.constant 15 : index
    %c0_11 = arith.constant 0 : index
    %15 = vector.load %arg10[%c0_9, %c15_10, %c0_11] : memref<10x33x48xf32, #tpu.memory_space<vmem>>, vector<8x16x48xf32>
    %c0_12 = arith.constant 0 : index
    %c0_13 = arith.constant 0 : index
    %c0_14 = arith.constant 0 : index
    %16 = vector.load %arg5[%c0_12, %c0_13, %c0_14] : memref<3x3x48xf32, #tpu.memory_space<vmem>>, vector<1x1x48xf32>
    %17 = vector.shape_cast %16 : vector<1x1x48xf32> to vector<1x48xf32>
    %18 = vector.shape_cast %17 : vector<1x48xf32> to vector<1x1x48xf32>
    %19 = vector.broadcast %18 : vector<1x1x48xf32> to vector<8x16x48xf32>
    %20 = arith.mulf %15, %19 : vector<8x16x48xf32>
    %21 = arith.addf %14, %20 : vector<8x16x48xf32>
    %c0_15 = arith.constant 0 : index
    %c16 = arith.constant 16 : index
    %c0_16 = arith.constant 0 : index
    %22 = vector.load %arg10[%c0_15, %c16, %c0_16] : memref<10x33x48xf32, #tpu.memory_space<vmem>>, vector<8x16x48xf32>
    %c0_17 = arith.constant 0 : index
    %c1 = arith.constant 1 : index
    %c0_18 = arith.constant 0 : index
    %23 = vector.load %arg5[%c0_17, %c1, %c0_18] : memref<3x3x48xf32, #tpu.memory_space<vmem>>, vector<1x1x48xf32>
    %24 = vector.shape_cast %23 : vector<1x1x48xf32> to vector<1x48xf32>
    %25 = vector.shape_cast %24 : vector<1x48xf32> to vector<1x1x48xf32>
    %26 = vector.broadcast %25 : vector<1x1x48xf32> to vector<8x16x48xf32>
    %27 = arith.mulf %22, %26 : vector<8x16x48xf32>
    %28 = arith.addf %21, %27 : vector<8x16x48xf32>
    %c0_19 = arith.constant 0 : index
    %c17 = arith.constant 17 : index
    %c0_20 = arith.constant 0 : index
    %29 = vector.load %arg10[%c0_19, %c17, %c0_20] : memref<10x33x48xf32, #tpu.memory_space<vmem>>, vector<8x16x48xf32>
    %c0_21 = arith.constant 0 : index
    %c2 = arith.constant 2 : index
    %c0_22 = arith.constant 0 : index
    %30 = vector.load %arg5[%c0_21, %c2, %c0_22] : memref<3x3x48xf32, #tpu.memory_space<vmem>>, vector<1x1x48xf32>
    %31 = vector.shape_cast %30 : vector<1x1x48xf32> to vector<1x48xf32>
    %32 = vector.shape_cast %31 : vector<1x48xf32> to vector<1x1x48xf32>
    %33 = vector.broadcast %32 : vector<1x1x48xf32> to vector<8x16x48xf32>
    %34 = arith.mulf %29, %33 : vector<8x16x48xf32>
    %35 = arith.addf %28, %34 : vector<8x16x48xf32>
    %c1_23 = arith.constant 1 : index
    %c15_24 = arith.constant 15 : index
    %c0_25 = arith.constant 0 : index
    %36 = vector.load %arg10[%c1_23, %c15_24, %c0_25] : memref<10x33x48xf32, #tpu.memory_space<vmem>>, vector<8x16x48xf32>
    %c1_26 = arith.constant 1 : index
    %c0_27 = arith.constant 0 : index
    %c0_28 = arith.constant 0 : index
    %37 = vector.load %arg5[%c1_26, %c0_27, %c0_28] : memref<3x3x48xf32, #tpu.memory_space<vmem>>, vector<1x1x48xf32>
    %38 = vector.shape_cast %37 : vector<1x1x48xf32> to vector<1x48xf32>
    %39 = vector.shape_cast %38 : vector<1x48xf32> to vector<1x1x48xf32>
    %40 = vector.broadcast %39 : vector<1x1x48xf32> to vector<8x16x48xf32>
    %41 = arith.mulf %36, %40 : vector<8x16x48xf32>
    %42 = arith.addf %35, %41 : vector<8x16x48xf32>
    %c1_29 = arith.constant 1 : index
    %c16_30 = arith.constant 16 : index
    %c0_31 = arith.constant 0 : index
    %43 = vector.load %arg10[%c1_29, %c16_30, %c0_31] : memref<10x33x48xf32, #tpu.memory_space<vmem>>, vector<8x16x48xf32>
    %c1_32 = arith.constant 1 : index
    %c1_33 = arith.constant 1 : index
    %c0_34 = arith.constant 0 : index
    %44 = vector.load %arg5[%c1_32, %c1_33, %c0_34] : memref<3x3x48xf32, #tpu.memory_space<vmem>>, vector<1x1x48xf32>
    %45 = vector.shape_cast %44 : vector<1x1x48xf32> to vector<1x48xf32>
    %46 = vector.shape_cast %45 : vector<1x48xf32> to vector<1x1x48xf32>
    %47 = vector.broadcast %46 : vector<1x1x48xf32> to vector<8x16x48xf32>
    %48 = arith.mulf %43, %47 : vector<8x16x48xf32>
    %49 = arith.addf %42, %48 : vector<8x16x48xf32>
    %c1_35 = arith.constant 1 : index
    %c17_36 = arith.constant 17 : index
    %c0_37 = arith.constant 0 : index
    %50 = vector.load %arg10[%c1_35, %c17_36, %c0_37] : memref<10x33x48xf32, #tpu.memory_space<vmem>>, vector<8x16x48xf32>
    %c1_38 = arith.constant 1 : index
    %c2_39 = arith.constant 2 : index
    %c0_40 = arith.constant 0 : index
    %51 = vector.load %arg5[%c1_38, %c2_39, %c0_40] : memref<3x3x48xf32, #tpu.memory_space<vmem>>, vector<1x1x48xf32>
    %52 = vector.shape_cast %51 : vector<1x1x48xf32> to vector<1x48xf32>
    %53 = vector.shape_cast %52 : vector<1x48xf32> to vector<1x1x48xf32>
    %54 = vector.broadcast %53 : vector<1x1x48xf32> to vector<8x16x48xf32>
    %55 = arith.mulf %50, %54 : vector<8x16x48xf32>
    %56 = arith.addf %49, %55 : vector<8x16x48xf32>
    %c2_41 = arith.constant 2 : index
    %c15_42 = arith.constant 15 : index
    %c0_43 = arith.constant 0 : index
    %57 = vector.load %arg10[%c2_41, %c15_42, %c0_43] : memref<10x33x48xf32, #tpu.memory_space<vmem>>, vector<8x16x48xf32>
    %c2_44 = arith.constant 2 : index
    %c0_45 = arith.constant 0 : index
    %c0_46 = arith.constant 0 : index
    %58 = vector.load %arg5[%c2_44, %c0_45, %c0_46] : memref<3x3x48xf32, #tpu.memory_space<vmem>>, vector<1x1x48xf32>
    %59 = vector.shape_cast %58 : vector<1x1x48xf32> to vector<1x48xf32>
    %60 = vector.shape_cast %59 : vector<1x48xf32> to vector<1x1x48xf32>
    %61 = vector.broadcast %60 : vector<1x1x48xf32> to vector<8x16x48xf32>
    %62 = arith.mulf %57, %61 : vector<8x16x48xf32>
    %63 = arith.addf %56, %62 : vector<8x16x48xf32>
    %c2_47 = arith.constant 2 : index
    %c16_48 = arith.constant 16 : index
    %c0_49 = arith.constant 0 : index
    %64 = vector.load %arg10[%c2_47, %c16_48, %c0_49] : memref<10x33x48xf32, #tpu.memory_space<vmem>>, vector<8x16x48xf32>
    %c2_50 = arith.constant 2 : index
    %c1_51 = arith.constant 1 : index
    %c0_52 = arith.constant 0 : index
    %65 = vector.load %arg5[%c2_50, %c1_51, %c0_52] : memref<3x3x48xf32, #tpu.memory_space<vmem>>, vector<1x1x48xf32>
    %66 = vector.shape_cast %65 : vector<1x1x48xf32> to vector<1x48xf32>
    %67 = vector.shape_cast %66 : vector<1x48xf32> to vector<1x1x48xf32>
    %68 = vector.broadcast %67 : vector<1x1x48xf32> to vector<8x16x48xf32>
    %69 = arith.mulf %64, %68 : vector<8x16x48xf32>
    %70 = arith.addf %63, %69 : vector<8x16x48xf32>
    %c2_53 = arith.constant 2 : index
    %c17_54 = arith.constant 17 : index
    %c0_55 = arith.constant 0 : index
    %71 = vector.load %arg10[%c2_53, %c17_54, %c0_55] : memref<10x33x48xf32, #tpu.memory_space<vmem>>, vector<8x16x48xf32>
    %c2_56 = arith.constant 2 : index
    %c2_57 = arith.constant 2 : index
    %c0_58 = arith.constant 0 : index
    %72 = vector.load %arg5[%c2_56, %c2_57, %c0_58] : memref<3x3x48xf32, #tpu.memory_space<vmem>>, vector<1x1x48xf32>
    %73 = vector.shape_cast %72 : vector<1x1x48xf32> to vector<1x48xf32>
    %74 = vector.shape_cast %73 : vector<1x48xf32> to vector<1x1x48xf32>
    %75 = vector.broadcast %74 : vector<1x1x48xf32> to vector<8x16x48xf32>
    %76 = arith.mulf %71, %75 : vector<8x16x48xf32>
    %77 = arith.addf %70, %76 : vector<8x16x48xf32>
    %c0_59 = arith.constant 0 : index
    %c0_60 = arith.constant 0 : index
    %78 = vector.load %arg6[%c0_59, %c0_60] : memref<1x48xf32, #tpu.memory_space<vmem>>, vector<1x48xf32>
    %79 = vector.shape_cast %78 : vector<1x48xf32> to vector<1x1x48xf32>
    %80 = vector.broadcast %79 : vector<1x1x48xf32> to vector<8x16x48xf32>
    %81 = arith.addf %77, %80 : vector<8x16x48xf32>
    %cst_61 = arith.constant 0.000000e+00 : f32
    %cst_62 = arith.constant 6.000000e+00 : f32
    %82 = vector.broadcast %cst_61 : f32 to vector<8x16x48xf32>
    %83 = arith.maximumf %82, %81 : vector<8x16x48xf32>
    %84 = vector.broadcast %cst_62 : f32 to vector<8x16x48xf32>
    %85 = arith.minimumf %84, %83 : vector<8x16x48xf32>
    %86 = vector.shape_cast %85 : vector<8x16x48xf32> to vector<128x48xf32>
    %87 = arith.truncf %86 : vector<128x48xf32> to vector<128x48xbf16>
    %c0_63 = arith.constant 0 : index
    %c0_64 = arith.constant 0 : index
    %88 = vector.load %arg7[%c0_63, %c0_64] : memref<48x8xbf16, #tpu.memory_space<vmem>>, vector<48x8xbf16>
    %cst_65 = arith.constant dense<0.000000e+00> : vector<128x8xf32>
    %89 = tpu.matmul %87, %88, %cst_65 {dimension_numbers = #tpu.dot_dimension_numbers<[1], [0], [0], [1], [0, 0, 1, 1], [], []>} : vector<128x48xbf16>, vector<48x8xbf16>, vector<128x8xf32> -> vector<128x8xf32>
    %90 = arith.addf %13, %89 : vector<128x8xf32>
    %c0_66 = arith.constant 0 : index
    %c0_67 = arith.constant 0 : index
    %91 = vector.load %arg8[%c0_66, %c0_67] : memref<1x8xf32, #tpu.memory_space<vmem>>, vector<1x8xf32>
    %92 = vector.broadcast %91 : vector<1x8xf32> to vector<128x8xf32>
    %93 = arith.addf %90, %92 : vector<128x8xf32>
    %c0_68 = arith.constant 0 : index
    %94 = arith.index_cast %1 : i32 to index
    %c0_69 = arith.constant 0 : index
    %c0_70 = arith.constant 0 : index
    %95 = vector.load %arg2[%c0_68, %94, %c0_69, %c0_70] : memref<1x16x16x8xf32, #tpu.memory_space<vmem>>, vector<1x8x16x8xf32>
    %96 = vector.shape_cast %95 : vector<1x8x16x8xf32> to vector<8x16x8xf32>
    %97 = vector.shape_cast %96 : vector<8x16x8xf32> to vector<128x8xf32>
    %98 = arith.addf %93, %97 : vector<128x8xf32>
    %99 = vector.shape_cast %98 : vector<128x8xf32> to vector<8x16x8xf32>
    %c0_71 = arith.constant 0 : index
    %c0_72 = arith.constant 0 : index
    %c0_73 = arith.constant 0 : index
    %c0_74 = arith.constant 0 : index
    %100 = vector.load %arg9[%c0_71, %c0_72, %c0_73, %c0_74] : memref<1x8x16x8xf32, #tpu.memory_space<vmem>>, vector<1x8x16x8xf32>
    %101 = vector.shape_cast %100 : vector<1x8x16x8xf32> to vector<8x16x8xf32>
    %102 = vector.shape_cast %99 : vector<8x16x8xf32> to vector<1x8x16x8xf32>
    tpu.vector_store %arg9[%c0_71, %c0_72, %c0_73, %c0_74], %102 {strides = array<i32>} : memref<1x8x16x8xf32, #tpu.memory_space<vmem>>, vector<1x8x16x8xf32>,
    return
  }
  func.func @transform_0(%arg0: i32, %arg1: i32) -> (i32, i32, i32, i32) {
    %c0_i32 = arith.constant 0 : i32
    %c0_i32_0 = arith.constant 0 : i32
    %c0_i32_1 = arith.constant 0 : i32
    %c0_i32_2 = arith.constant 0 : i32
    return %arg0, %c0_i32, %c0_i32_0, %c0_i32_1 : i32, i32, i32, i32
  }
  func.func @transform_1(%arg0: i32, %arg1: i32) -> (i32, i32) {
    %c0_i32 = arith.constant 0 : i32
    %c0_i32_0 = arith.constant 0 : i32
    %c0_i32_1 = arith.constant 0 : i32
    return %c0_i32, %c0_i32_0 : i32, i32
  }
  func.func @transform_2(%arg0: i32, %arg1: i32) -> (i32, i32) {
    %c0_i32 = arith.constant 0 : i32
    %c0_i32_0 = arith.constant 0 : i32
    %c0_i32_1 = arith.constant 0 : i32
    return %c0_i32, %c0_i32_0 : i32, i32
  }
  func.func @transform_3(%arg0: i32, %arg1: i32) -> (i32, i32, i32) {
    %c0_i32 = arith.constant 0 : i32
    %c0_i32_0 = arith.constant 0 : i32
    %c0_i32_1 = arith.constant 0 : i32
    %c0_i32_2 = arith.constant 0 : i32
    return %c0_i32, %c0_i32_0, %c0_i32_1 : i32, i32, i32
  }
  func.func @transform_4(%arg0: i32, %arg1: i32) -> (i32, i32) {
    %c0_i32 = arith.constant 0 : i32
    %c0_i32_0 = arith.constant 0 : i32
    %c0_i32_1 = arith.constant 0 : i32
    return %c0_i32, %c0_i32_0 : i32, i32
  }
  func.func @transform_5(%arg0: i32, %arg1: i32) -> (i32, i32) {
    %c0_i32 = arith.constant 0 : i32
    %c0_i32_0 = arith.constant 0 : i32
    %c0_i32_1 = arith.constant 0 : i32
    return %c0_i32, %c0_i32_0 : i32, i32
  }
  func.func @transform_6(%arg0: i32, %arg1: i32) -> (i32, i32) {
    %c0_i32 = arith.constant 0 : i32
    %c0_i32_0 = arith.constant 0 : i32
    %c0_i32_1 = arith.constant 0 : i32
    return %c0_i32, %c0_i32_0 : i32, i32
  }
  func.func @transform_7(%arg0: i32, %arg1: i32) -> (i32, i32, i32, i32) {
    %c0_i32 = arith.constant 0 : i32
    %c0_i32_0 = arith.constant 0 : i32
    %c0_i32_1 = arith.constant 0 : i32
    return %arg0, %arg1, %c0_i32, %c0_i32_0 : i32, i32, i32, i32
  }
}

</mosaic_0001>

<llo_original>
// kernel: tpu_custom_call.1
$region0: #{tpu_custom_call.1}
  #allocation0 [shape = 'u32[]', space=smem, size = 0x4, offset = 0x4, fixed_abs, tag = 'smem constant byte address 0x4 - core index']
  #allocation1 [shape = 'u32[72,128]{1,0:T(1,128)}', space=vmem, size = 0x9000, scoped, tag = 'internal scratch']
  #allocation2 [shape = 'f32[10,33,48]{2,1,0:T(8,128)}', space=vmem, size = 0x32000, scoped, tag = 'scratch operand']
  %s0 = inlined_call_operand.vmem [shape: f32[2,16,16,8], index: 0, kind: input, shape index: {}]
  %s1 = inlined_call_operand.vmem [shape: bf16[8,48], index: 1, kind: input, shape index: {}]
  %s2 = inlined_call_operand.vmem [shape: f32[1,48], index: 2, kind: input, shape index: {}]
  %s3 = inlined_call_operand.vmem [shape: f32[3,3,48], index: 3, kind: input, shape index: {}]
  %s4 = inlined_call_operand.vmem [shape: f32[1,48], index: 4, kind: input, shape index: {}]
  %s5 = inlined_call_operand.vmem [shape: bf16[48,8], index: 5, kind: input, shape index: {}]
  %s6 = inlined_call_operand.vmem [shape: f32[1,8], index: 6, kind: input, shape index: {}]
  %s7 = inlined_call_operand.vmem [shape: f32[2,16,16,8], index: 7, kind: output, shape index: {}]
  %s8 = sld [smem:[#allocation0]]
  $region69: #{tpu_custom_call.1} parent=0
    _
  %s10 = ssub.s32 1, %s8
  %s11 = scalar_select 0, %s10, %s8
  loop: start=0, step=1, limit=6
  $region2: #{tpu_custom_call.1} parent=0 // loop_pre_header
    _
  $region3: #{tpu_custom_call.1} parent=0 // loop_header
    %s13 = sphi 0, %s17
    %p14 = scmp.ge.s32.totalorder %s13, 6
    %s20 = sphi 0, %s32
    %s21 = sphi 0, %s28
    %s22 = sphi 0, %s20
    %s23 = sphi 0, %s21
    %s24 = sphi 0, %s22
    %s25 = sphi 0, %s23
    %s35 = sphi 0, %s37
    %s38 = sphi 0, %s35
    %s39 = sphi 0, %s38
    %s55 = sphi 0, %s39
    %s59 = sphi 0, %s59
    %s61 = sphi 0, %s59
    %s62 = sphi 0, %s61
    %s76 = sphi 0, %s62
    %s80 = sphi 0, %s80
    %s82 = sphi 0, %s80
    %s83 = sphi 0, %s82
    %s97 = sphi 0, %s83
    %s101 = sphi 0, %s101
    %s103 = sphi 0, %s101
    %s104 = sphi 0, %s103
    %s118 = sphi 0, %s104
    %s122 = sphi 0, %s122
    %s124 = sphi 0, %s122
    %s125 = sphi 0, %s124
    %s139 = sphi 0, %s125
    %s143 = sphi 0, %s143
    %s145 = sphi 0, %s143
    %s146 = sphi 0, %s145
    %s160 = sphi 0, %s146
    %s164 = sphi 0, %s164
    %s166 = sphi 0, %s164
    %s167 = sphi 0, %s166
    %s181 = sphi 0, %s167
    %s189 = sphi 0, %s191
    %s192 = sphi 0, %s189
    %s193 = sphi 0, %s192
    %s209 = sphi 0, %s193
  $region4: #{tpu_custom_call.1} parent=0 // loop_header_branch
    %16 = sbr.rel (%p14) target = $region8
  $region5: #{tpu_custom_call.1} parent=0 // loop_body
    %s18 = ssub.s32 %s13, 1
    %s19 = ssub.s32 %s13, 2
    %s26 = sadd.s32 1, %s21
    %p27 = scmp.ge.s32.totalorder %s26, 2
    %s28 = scalar_select %p27, 0, %s26
    %s29 = sadd.s32 1, %s20
    %s30 = scalar_select %p27, %s29, %s20
    %p31 = scmp.ge.s32.totalorder %s30, 2
    %s32 = scalar_select %p31, 0, %s30
    %s33 = ssub.s32 %s20, %s32
    %p34 = scmp.eq.s32.totalorder %s33, 0
    %s36 = sadd.s32 %s35, 1
    %s37 = scalar_select %p34, %s35, %s36
    %p40 = pneg %p34
    %p41 = scmp.eq.s32.totalorder %s13, 3
    %p42 = por %p40, %p41
    %p43 = scmp.ne.s32.totalorder %s35, %s38
    %p44 = scmp.eq.s32.totalorder %s13, 0
    %p45 = por %p43, %p44
    %p46 = scmp.ne.s32.totalorder %s35, %s38
    %p47 = scmp.eq.s32.totalorder %s18, 3
    %p48 = por %p46, %p47
    %p49 = scmp.ne.s32.totalorder %s38, %s39
    %p50 = scmp.eq.s32.totalorder %s18, 0
    %p51 = por %p49, %p50
    %p52 = scmp.ne.s32.totalorder %s38, %s39
    %p53 = scmp.eq.s32.totalorder %s19, 3
    %p54 = por %p52, %p53
    %p56 = scmp.ne.s32.totalorder %s39, %s55
    %p57 = scmp.eq.s32.totalorder %s19, 0
    %p58 = por %p56, %p57
    %s60 = sadd.s32 %s59, 1
    %p63 = scmp.eq.s32.totalorder %s13, 3
    %p64 = scmp.ne.s32.totalorder %s59, %s61
    %p65 = scmp.eq.s32.totalorder %s13, 0
    %p66 = por %p64, %p65
    %p67 = scmp.ne.s32.totalorder %s59, %s61
    %p68 = scmp.eq.s32.totalorder %s18, 3
    %p69 = por %p67, %p68
    %p70 = scmp.ne.s32.totalorder %s61, %s62
    %p71 = scmp.eq.s32.totalorder %s18, 0
    %p72 = por %p70, %p71
    %p73 = scmp.ne.s32.totalorder %s61, %s62
    %p74 = scmp.eq.s32.totalorder %s19, 3
    %p75 = por %p73, %p74
    %p77 = scmp.ne.s32.totalorder %s62, %s76
    %p78 = scmp.eq.s32.totalorder %s19, 0
    %p79 = por %p77, %p78
    %s81 = sadd.s32 %s80, 1
    %p84 = scmp.eq.s32.totalorder %s13, 3
    %p85 = scmp.ne.s32.totalorder %s80, %s82
    %p86 = scmp.eq.s32.totalorder %s13, 0
    %p87 = por %p85, %p86
    %p88 = scmp.ne.s32.totalorder %s80, %s82
    %p89 = scmp.eq.s32.totalorder %s18, 3
    %p90 = por %p88, %p89
    %p91 = scmp.ne.s32.totalorder %s82, %s83
    %p92 = scmp.eq.s32.totalorder %s18, 0
    %p93 = por %p91, %p92
    %p94 = scmp.ne.s32.totalorder %s82, %s83
    %p95 = scmp.eq.s32.totalorder %s19, 3
    %p96 = por %p94, %p95
    %p98 = scmp.ne.s32.totalorder %s83, %s97
    %p99 = scmp.eq.s32.totalorder %s19, 0
    %p100 = por %p98, %p99
    %s102 = sadd.s32 %s101, 1
    %p105 = scmp.eq.s32.totalorder %s13, 3
    %p106 = scmp.ne.s32.totalorder %s101, %s103
    %p107 = scmp.eq.s32.totalorder %s13, 0
    %p108 = por %p106, %p107
    %p109 = scmp.ne.s32.totalorder %s101, %s103
    %p110 = scmp.eq.s32.totalorder %s18, 3
    %p111 = por %p109, %p110
    %p112 = scmp.ne.s32.totalorder %s103, %s104
    %p113 = scmp.eq.s32.totalorder %s18, 0
    %p114 = por %p112, %p113
    %p115 = scmp.ne.s32.totalorder %s103, %s104
    %p116 = scmp.eq.s32.totalorder %s19, 3
    %p117 = por %p115, %p116
    %p119 = scmp.ne.s32.totalorder %s104, %s118
    %p120 = scmp.eq.s32.totalorder %s19, 0
    %p121 = por %p119, %p120
    %s123 = sadd.s32 %s122, 1
    %p126 = scmp.eq.s32.totalorder %s13, 3
    %p127 = scmp.ne.s32.totalorder %s122, %s124
    %p128 = scmp.eq.s32.totalorder %s13, 0
    %p129 = por %p127, %p128
    %p130 = scmp.ne.s32.totalorder %s122, %s124
    %p131 = scmp.eq.s32.totalorder %s18, 3
    %p132 = por %p130, %p131
    %p133 = scmp.ne.s32.totalorder %s124, %s125
    %p134 = scmp.eq.s32.totalorder %s18, 0
    %p135 = por %p133, %p134
    %p136 = scmp.ne.s32.totalorder %s124, %s125
    %p137 = scmp.eq.s32.totalorder %s19, 3
    %p138 = por %p136, %p137
    %p140 = scmp.ne.s32.totalorder %s125, %s139
    %p141 = scmp.eq.s32.totalorder %s19, 0
    %p142 = por %p140, %p141
    %s144 = sadd.s32 %s143, 1
    %p147 = scmp.eq.s32.totalorder %s13, 3
    %p148 = scmp.ne.s32.totalorder %s143, %s145
    %p149 = scmp.eq.s32.totalorder %s13, 0
    %p150 = por %p148, %p149
    %p151 = scmp.ne.s32.totalorder %s143, %s145
    %p152 = scmp.eq.s32.totalorder %s18, 3
    %p153 = por %p151, %p152
    %p154 = scmp.ne.s32.totalorder %s145, %s146
    %p155 = scmp.eq.s32.totalorder %s18, 0
    %p156 = por %p154, %p155
    %p157 = scmp.ne.s32.totalorder %s145, %s146
    %p158 = scmp.eq.s32.totalorder %s19, 3
    %p159 = por %p157, %p158
    %p161 = scmp.ne.s32.totalorder %s146, %s160
    %p162 = scmp.eq.s32.totalorder %s19, 0
    %p163 = por %p161, %p162
    %s165 = sadd.s32 %s164, 1
    %p168 = scmp.eq.s32.totalorder %s13, 3
    %p169 = scmp.ne.s32.totalorder %s164, %s166
    %p170 = scmp.eq.s32.totalorder %s13, 0
    %p171 = por %p169, %p170
    %p172 = scmp.ne.s32.totalorder %s164, %s166
    %p173 = scmp.eq.s32.totalorder %s18, 3
    %p174 = por %p172, %p173
    %p175 = scmp.ne.s32.totalorder %s166, %s167
    %p176 = scmp.eq.s32.totalorder %s18, 0
    %p177 = por %p175, %p176
    %p178 = scmp.ne.s32.totalorder %s166, %s167
    %p179 = scmp.eq.s32.totalorder %s19, 3
    %p180 = por %p178, %p179
    %p182 = scmp.ne.s32.totalorder %s167, %s181
    %p183 = scmp.eq.s32.totalorder %s19, 0
    %p184 = por %p182, %p183
    %s185 = ssub.s32 %s20, %s32
    %s186 = ssub.s32 %s21, %s28
    %s187 = sor.u32 %s185, %s186
    %p188 = scmp.eq.s32.totalorder %s187, 0
    %s190 = sadd.s32 %s189, 1
    %s191 = scalar_select %p188, %s189, %s190
    %p194 = pneg %p188
    %p195 = scmp.eq.s32.totalorder %s13, 3
    %p196 = por %p194, %p195
    %p197 = scmp.ne.s32.totalorder %s189, %s192
    %p198 = scmp.eq.s32.totalorder %s13, 0
    %p199 = por %p197, %p198
    %p200 = scmp.ne.s32.totalorder %s189, %s192
    %p201 = scmp.eq.s32.totalorder %s18, 3
    %p202 = por %p200, %p201
    %p203 = scmp.ne.s32.totalorder %s192, %s193
    %p204 = scmp.eq.s32.totalorder %s18, 0
    %p205 = por %p203, %p204
    %p206 = scmp.ne.s32.totalorder %s192, %s193
    %p207 = scmp.eq.s32.totalorder %s19, 3
    %p208 = por %p206, %p207
    %p210 = scmp.ne.s32.totalorder %s193, %s209
    %p211 = scmp.eq.s32.totalorder %s19, 0
    %p212 = por %p210, %p211
    %p213 = scmp.le.s32.totalorder 1, %s13
    %p214 = scmp.lt.s32.totalorder %s13, 5
    %p215 = pnand %p213, %p214
    %p216 = pneg %p215
    // Predicated region
    $region9: #{tpu_custom_call.1} parent=5 // pred_check
      _
    $region10: #{tpu_custom_call.1} parent=5 // pred_check_branch
      %218 = sbr.rel (%p215) target = $region12
    $region11: #{tpu_custom_call.1} parent=5 // pred_region
      %s219 = ssub.s32 %s13, 1
      // Predicated region
      $region13: #{tpu_custom_call.1} parent=11 // pred_check
        %p220 = pneg %p72
      $region14: #{tpu_custom_call.1} parent=11 // pred_check_branch
        %222 = sbr.rel (%p220) target = $region16
      $region15: #{tpu_custom_call.1} parent=11 // pred_region
        _
      $region16: #{tpu_custom_call.1} parent=11 // pred_fallthru
        _
      // Predicated region
      $region17: #{tpu_custom_call.1} parent=11 // pred_check
        %p223 = pneg %p93
      $region18: #{tpu_custom_call.1} parent=11 // pred_check_branch
        %225 = sbr.rel (%p223) target = $region20
      $region19: #{tpu_custom_call.1} parent=11 // pred_region
        _
      $region20: #{tpu_custom_call.1} parent=11 // pred_fallthru
        _
      // Predicated region
      $region21: #{tpu_custom_call.1} parent=11 // pred_check
        %p226 = pneg %p114
      $region22: #{tpu_custom_call.1} parent=11 // pred_check_branch
        %228 = sbr.rel (%p226) target = $region24
      $region23: #{tpu_custom_call.1} parent=11 // pred_region
        _
      $region24: #{tpu_custom_call.1} parent=11 // pred_fallthru
        _
      // Predicated region
      $region25: #{tpu_custom_call.1} parent=11 // pred_check
        %p229 = pneg %p135
      $region26: #{tpu_custom_call.1} parent=11 // pred_check_branch
        %231 = sbr.rel (%p229) target = $region28
      $region27: #{tpu_custom_call.1} parent=11 // pred_region
        _
      $region28: #{tpu_custom_call.1} parent=11 // pred_fallthru
        _
      // Predicated region
      $region29: #{tpu_custom_call.1} parent=11 // pred_check
        %p232 = pneg %p156
      $region30: #{tpu_custom_call.1} parent=11 // pred_check_branch
        %234 = sbr.rel (%p232) target = $region32
      $region31: #{tpu_custom_call.1} parent=11 // pred_region
        _
      $region32: #{tpu_custom_call.1} parent=11 // pred_fallthru
        _
      // Predicated region
      $region33: #{tpu_custom_call.1} parent=11 // pred_check
        %p235 = pneg %p177
      $region34: #{tpu_custom_call.1} parent=11 // pred_check_branch
        %237 = sbr.rel (%p235) target = $region36
      $region35: #{tpu_custom_call.1} parent=11 // pred_region
        _
      $region36: #{tpu_custom_call.1} parent=11 // pred_fallthru
        _
    $region12: #{tpu_custom_call.1} parent=5 // pred_fallthru
      _
    %p238 = scmp.lt.s32.totalorder %s13, 4
    // Predicated region
    $region37: #{tpu_custom_call.1} parent=5 // pred_check
      %p239 = pneg %p238
    $region38: #{tpu_custom_call.1} parent=5 // pred_check_branch
      %241 = sbr.rel (%p239) target = $region40
    $region39: #{tpu_custom_call.1} parent=5 // pred_region
      // Predicated region
      $region41: #{tpu_custom_call.1} parent=39 // pred_check
        %p242 = pneg %p45
      $region42: #{tpu_custom_call.1} parent=39 // pred_check_branch
        %244 = sbr.rel (%p242) target = $region44
      $region43: #{tpu_custom_call.1} parent=39 // pred_region
        %p245 = scmp.lt.s32.totalorder %s20, 1
        %s246 = scalar_select %p245, %s20, 1
        %s247 = smul.addr %s246, 32
        %s248 = smul.addr %s247, 8
        %s249 = scalar_lea.vmem %s0, %s248
      $region44: #{tpu_custom_call.1} parent=39 // pred_fallthru
        _
    $region40: #{tpu_custom_call.1} parent=5 // pred_fallthru
      _
    %p250 = scmp.le.s32.totalorder 1, %s13
    %p251 = scmp.lt.s32.totalorder %s13, 5
    %p252 = pnand %p250, %p251
    %p253 = pneg %p252
    // Predicated region
    $region45: #{tpu_custom_call.1} parent=5 // pred_check
      _
    $region46: #{tpu_custom_call.1} parent=5 // pred_check_branch
      %255 = sbr.rel (%p252) target = $region48
    $region47: #{tpu_custom_call.1} parent=5 // pred_region
      %s256 = ssub.s32 %s13, 1
      %p257 = scmp.lt.s32.totalorder %s22, 1
      %s258 = scalar_select %p257, %s22, 1
      %s259 = smul.addr %s258, 32
      %s260 = smul.addr %s259, 8
      %s261 = scalar_lea.vmem %s0, %s260
      %p262 = pneg %p51
      %p263 = pneg %p48
      %p264 = pneg %p72
      %p265 = pneg %p69
      %p266 = pneg %p93
      %p267 = pneg %p90
      %p268 = pneg %p114
      %p269 = pneg %p111
      %p270 = pneg %p135
      %p271 = pneg %p132
      %p272 = pneg %p156
      %p273 = pneg %p153
      %p274 = pneg %p177
      %p275 = pneg %p174
      %p276 = pneg %p205
      %p277 = pneg %p202
      %s278 = smul.u32 8, %s23
      %p279 = scmp.lt.s32.totalorder %s22, 1
      %s280 = scalar_select %p279, %s22, 1
      %p281 = scmp.lt.s32.totalorder %s278, 15
      %s282 = scalar_select %p281, %s278, 15
      %s283 = smul.addr %s282, 2
      %s284 = smul.addr %s280, 32
      %s285 = sadd.s32 %s283, %s284
      %s286 = smul.addr %s285, 8
      %s287 = scalar_lea.vmem %s7, %s286
      %p288 = scmp.lt.s32.totalorder %s22, 1
      %s289 = scalar_select %p288, %s22, 1
      %s290 = smul.addr %s289, 32
      %s291 = smul.addr %s290, 8
      %s292 = scalar_lea.vmem %s0, %s291
      %s293 = smul.u32 8, %s23
      %p294 = scmp.lt.s32.totalorder %s22, 1
      %s295 = scalar_select %p294, %s22, 1
      %p296 = scmp.lt.s32.totalorder %s293, 15
      %s297 = scalar_select %p296, %s293, 15
      %s298 = smul.addr %s297, 2
      %s299 = smul.addr %s295, 32
      %s300 = sadd.s32 %s298, %s299
      %s301 = smul.addr %s300, 8
      %s302 = scalar_lea.vmem %s7, %s301
      %s303 = smul.u32 8, %s23
      %s305 = smul.u32 %s23, 8
      %s306 = ssub.s32 %s305, 1
      %vm307 = vcmask 385024
      %308 = vst.msk [vmem:[#allocation2 + $0xf] sm:$0x1] %vm307, 0.0
      %309 = vst.msk [vmem:[#allocation2 + $0x37] sm:$0x1] %vm307, 0.0
      %310 = vst.msk [vmem:[#allocation2 + $0x5f] sm:$0x1] %vm307, 0.0
      %311 = vst.msk [vmem:[#allocation2 + $0x87] sm:$0x1] %vm307, 0.0
      %312 = vst.msk [vmem:[#allocation2 + $0xaf] sm:$0x1] %vm307, 0.0
      %313 = vst.msk [vmem:[#allocation2 + $0xd7] sm:$0x1] %vm307, 0.0
      %314 = vst.msk [vmem:[#allocation2 + $0xff] sm:$0x1] %vm307, 0.0
      %315 = vst.msk [vmem:[#allocation2 + $0x127] sm:$0x1] %vm307, 0.0
      %316 = vst.msk [vmem:[#allocation2 + $0x14f] sm:$0x1] %vm307, 0.0
      %317 = vst.msk [vmem:[#allocation2 + $0x177] sm:$0x1] %vm307, 0.0
      %318 = vst.msk [vmem:[#allocation2 + $0x20] sm:$0x1] %vm307, 0.0
      %319 = vst.msk [vmem:[#allocation2 + $0x48] sm:$0x1] %vm307, 0.0
      %320 = vst.msk [vmem:[#allocation2 + $0x70] sm:$0x1] %vm307, 0.0
      %321 = vst.msk [vmem:[#allocation2 + $0x98] sm:$0x1] %vm307, 0.0
      %322 = vst.msk [vmem:[#allocation2 + $0xc0] sm:$0x1] %vm307, 0.0
      %323 = vst.msk [vmem:[#allocation2 + $0xe8] sm:$0x1] %vm307, 0.0
      %324 = vst.msk [vmem:[#allocation2 + $0x110] sm:$0x1] %vm307, 0.0
      %325 = vst.msk [vmem:[#allocation2 + $0x138] sm:$0x1] %vm307, 0.0
      %326 = vst.msk [vmem:[#allocation2 + $0x160] sm:$0x1] %vm307, 0.0
      %327 = vst.msk [vmem:[#allocation2 + $0x188] sm:$0x1] %vm307, 0.0
      %p328 = scmp.eq.s32.totalorder %s23, 0
      // Predicated region
      $region49: #{tpu_custom_call.1} parent=47 // pred_check
        %p329 = pneg %p328
      $region50: #{tpu_custom_call.1} parent=47 // pred_check_branch
        %331 = sbr.rel (%p329) target = $region52
      $region51: #{tpu_custom_call.1} parent=47 // pred_region
        %s332 = smul.u32 %s305, 16
        %s333 = scalar_lea.vmem %s292, %s332
        %v334 = vld [vmem:[%s333] sm:$0xff]
        %v335 = vld [vmem:[%s333 + $0x8] sm:$0xff]
        %v336 = vld [vmem:[%s333 + $0x10] sm:$0xff]
        %v337 = vld [vmem:[%s333 + $0x18] sm:$0xff]
        %v338 = vld [vmem:[%s333 + $0x20] sm:$0xff]
        %v339 = vld [vmem:[%s333 + $0x28] sm:$0xff]
        %v340 = vld [vmem:[%s333 + $0x30] sm:$0xff]
        %v341 = vld [vmem:[%s333 + $0x38] sm:$0xff]
        %v342 = vld [vmem:[%s333 + $0x40] sm:$0xff]
        %v343 = vld [vmem:[%s333 + $0x48] sm:$0xff]
        %v344 = vld [vmem:[%s333 + $0x50] sm:$0xff]
        %v345 = vld [vmem:[%s333 + $0x58] sm:$0xff]
        %v346 = vld [vmem:[%s333 + $0x60] sm:$0xff]
        %v347 = vld [vmem:[%s333 + $0x68] sm:$0xff]
        %v348 = vld [vmem:[%s333 + $0x70] sm:$0xff]
        %v349 = vld [vmem:[%s333 + $0x78] sm:$0xff]
        %v350 = vld [vmem:[%s333 + $0x80] sm:$0xff]
        %v351 = vld [vmem:[%s333 + $0x88] sm:$0xff]
        %v352 = vpack.c.bf16 %v335, %v334
        %v353 = vpack.c.bf16 %v337, %v336
        %v354 = vpack.c.bf16 %v339, %v338
        %v355 = vpack.c.bf16 %v341, %v340
        %v356 = vpack.c.bf16 %v343, %v342
        %v357 = vpack.c.bf16 %v345, %v344
        %v358 = vpack.c.bf16 %v347, %v346
        %v359 = vpack.c.bf16 %v349, %v348
        %v360 = vpack.c.bf16 %v351, %v350
        %v361 = vld [vmem:[%s1] sm:$0xf]
        %v362 = vld [vmem:[%s2] sm:$0x1]
        %v364 = vperm.slane %v362, 0
        %vm366 = vcmask 64512
        %v368 = vsel %vm366, %v352, 0
        %v371 = vsel %vm366, %v353, 0
        %v374 = vsel %vm366, %v354, 0
        %v377 = vsel %vm366, %v355, 0
        %v380 = vsel %vm366, %v356, 0
        %v383 = vsel %vm366, %v357, 0
        %v386 = vsel %vm366, %v358, 0
        %v389 = vsel %vm366, %v359, 0
        %v392 = vsel %vm366, %v360, 0
        %vm394 = vcmask 1043456
        %v396 = vsel %vm394, %v361, 0
        %398 = vmatpush.bf16.msra.mxu0 0
        %399 = vmatpush.bf16.msra.mxu0 0
        %400 = vmatpush.bf16.msra.mxu0 0
        %401 = vmatpush.bf16.msra.mxu0 0
        %402 = vmatpush.bf16.msra.mxu0 0
        %403 = vmatpush.bf16.msra.mxu0 0
        %404 = vmatpush.bf16.msra.mxu0 0
        %405 = vmatpush.bf16.msra.mxu0 %v396
        %406 = vmatmul.bf16.gmra.mxu0 %v368
        %v407 = vpop.f32.mrf.mxu0
        %v408 = vadd.f32 %v364, %v407
        %v409 = vpop.f32.mrf.mxu0
        %v410 = vadd.f32 %v364, %v409
        %411 = vmatmul.bf16.gmra.mxu0 %v371
        %v412 = vpop.f32.mrf.mxu0
        %v413 = vadd.f32 %v364, %v412
        %v414 = vpop.f32.mrf.mxu0
        %v415 = vadd.f32 %v364, %v414
        %416 = vmatmul.bf16.gmra.mxu0 %v374
        %v417 = vpop.f32.mrf.mxu0
        %v418 = vadd.f32 %v364, %v417
        %v419 = vpop.f32.mrf.mxu0
        %v420 = vadd.f32 %v364, %v419
        %421 = vmatmul.bf16.gmra.mxu0 %v377
        %v422 = vpop.f32.mrf.mxu0
        %v423 = vadd.f32 %v364, %v422
        %v424 = vpop.f32.mrf.mxu0
        %v425 = vadd.f32 %v364, %v424
        %426 = vmatmul.bf16.gmra.mxu0 %v380
        %v427 = vpop.f32.mrf.mxu0
        %v428 = vadd.f32 %v364, %v427
        %v429 = vpop.f32.mrf.mxu0
        %v430 = vadd.f32 %v364, %v429
        %431 = vmatmul.bf16.gmra.mxu0 %v383
        %v432 = vpop.f32.mrf.mxu0
        %v433 = vadd.f32 %v364, %v432
        %v434 = vpop.f32.mrf.mxu0
        %v435 = vadd.f32 %v364, %v434
        %436 = vmatmul.bf16.gmra.mxu0 %v386
        %v437 = vpop.f32.mrf.mxu0
        %v438 = vadd.f32 %v364, %v437
        %v439 = vpop.f32.mrf.mxu0
        %v440 = vadd.f32 %v364, %v439
        %441 = vmatmul.bf16.gmra.mxu0 %v389
        %v442 = vpop.f32.mrf.mxu0
        %v443 = vadd.f32 %v364, %v442
        %v444 = vpop.f32.mrf.mxu0
        %v445 = vadd.f32 %v364, %v444
        %446 = vmatmul.bf16.gmra.mxu0 %v392
        %v447 = vpop.f32.mrf.mxu0
        %v448 = vadd.f32 %v364, %v447
        %v449 = vpop.f32.mrf.mxu0
        %v450 = vadd.f32 %v364, %v449
        %451 = vdwg.mxu0
        %v452 = vmax.f32 %v408, 0.0
        %v453 = vmax.f32 %v410, 0.0
        %v454 = vmax.f32 %v413, 0.0
        %v455 = vmax.f32 %v415, 0.0
        %v456 = vmax.f32 %v418, 0.0
        %v457 = vmax.f32 %v420, 0.0
        %v458 = vmax.f32 %v423, 0.0
        %v459 = vmax.f32 %v425, 0.0
        %v460 = vmax.f32 %v428, 0.0
        %v461 = vmax.f32 %v430, 0.0
        %v462 = vmax.f32 %v433, 0.0
        %v463 = vmax.f32 %v435, 0.0
        %v464 = vmax.f32 %v438, 0.0
        %v465 = vmax.f32 %v440, 0.0
        %v466 = vmax.f32 %v443, 0.0
        %v467 = vmax.f32 %v445, 0.0
        %v468 = vmax.f32 %v448, 0.0
        %v469 = vmax.f32 %v450, 0.0
        %v470 = vmin.f32 %v452, 6.0
        %v471 = vmin.f32 %v453, 6.0
        %v472 = vmin.f32 %v454, 6.0
        %v473 = vmin.f32 %v455, 6.0
        %v474 = vmin.f32 %v456, 6.0
        %v475 = vmin.f32 %v457, 6.0
        %v476 = vmin.f32 %v458, 6.0
        %v477 = vmin.f32 %v459, 6.0
        %v478 = vmin.f32 %v460, 6.0
        %v479 = vmin.f32 %v461, 6.0
        %v480 = vmin.f32 %v462, 6.0
        %v481 = vmin.f32 %v463, 6.0
        %v482 = vmin.f32 %v464, 6.0
        %v483 = vmin.f32 %v465, 6.0
        %v484 = vmin.f32 %v466, 6.0
        %v485 = vmin.f32 %v467, 6.0
        %v486 = vmin.f32 %v468, 6.0
        %v487 = vmin.f32 %v469, 6.0
        %vm488 = vcmask 392192
        %489 = vst.msk [vmem:[#allocation2 + $0xf] sm:$0xff] %vm488, 0.0
        %490 = vst.msk [vmem:[#allocation2 + $0x17] sm:$0xff] %vm488, 0.0
        %vm491 = vcmask 386048
        %492 = vst.msk [vmem:[#allocation2 + $0x1f] sm:$0x3] %vm491, 0.0
        %s493 = scalar_lea.vmem [#allocation2], 40
        %494 = vst.msk [vmem:[%s493 + $0x10] sm:$0xff] %vm488, %v470
        %495 = vst.msk [vmem:[%s493 + $0x18] sm:$0xff] %vm488, %v471
        %496 = vst.msk [vmem:[%s493 + $0x38] sm:$0xff] %vm488, %v472
        %497 = vst.msk [vmem:[%s493 + $0x40] sm:$0xff] %vm488, %v473
        %498 = vst.msk [vmem:[%s493 + $0x60] sm:$0xff] %vm488, %v474
        %499 = vst.msk [vmem:[%s493 + $0x68] sm:$0xff] %vm488, %v475
        %500 = vst.msk [vmem:[%s493 + $0x88] sm:$0xff] %vm488, %v476
        %501 = vst.msk [vmem:[%s493 + $0x90] sm:$0xff] %vm488, %v477
        %502 = vst.msk [vmem:[%s493 + $0xb0] sm:$0xff] %vm488, %v478
        %503 = vst.msk [vmem:[%s493 + $0xb8] sm:$0xff] %vm488, %v479
        %504 = vst.msk [vmem:[%s493 + $0xd8] sm:$0xff] %vm488, %v480
        %505 = vst.msk [vmem:[%s493 + $0xe0] sm:$0xff] %vm488, %v481
        %506 = vst.msk [vmem:[%s493 + $0x100] sm:$0xff] %vm488, %v482
        %507 = vst.msk [vmem:[%s493 + $0x108] sm:$0xff] %vm488, %v483
        %508 = vst.msk [vmem:[%s493 + $0x128] sm:$0xff] %vm488, %v484
        %509 = vst.msk [vmem:[%s493 + $0x130] sm:$0xff] %vm488, %v485
        %510 = vst.msk [vmem:[%s493 + $0x150] sm:$0xff] %vm488, %v486
        %511 = vst.msk [vmem:[%s493 + $0x158] sm:$0xff] %vm488, %v487
      $region52: #{tpu_custom_call.1} parent=47 // pred_fallthru
        _
      %p512 = scmp.eq.s32.totalorder %s23, 1
      // Predicated region
      $region53: #{tpu_custom_call.1} parent=47 // pred_check
        %p513 = pneg %p512
      $region54: #{tpu_custom_call.1} parent=47 // pred_check_branch
        %515 = sbr.rel (%p513) target = $region56
      $region55: #{tpu_custom_call.1} parent=47 // pred_region
        %s516 = smul.u32 %s306, 16
        %s517 = scalar_lea.vmem %s292, %s516
        %v518 = vld [vmem:[%s517] sm:$0xff]
        %v519 = vld [vmem:[%s517 + $0x8] sm:$0xff]
        %v520 = vld [vmem:[%s517 + $0x10] sm:$0xff]
        %v521 = vld [vmem:[%s517 + $0x18] sm:$0xff]
        %v522 = vld [vmem:[%s517 + $0x20] sm:$0xff]
        %v523 = vld [vmem:[%s517 + $0x28] sm:$0xff]
        %v524 = vld [vmem:[%s517 + $0x30] sm:$0xff]
        %v525 = vld [vmem:[%s517 + $0x38] sm:$0xff]
        %v526 = vld [vmem:[%s517 + $0x40] sm:$0xff]
        %v527 = vld [vmem:[%s517 + $0x48] sm:$0xff]
        %v528 = vld [vmem:[%s517 + $0x50] sm:$0xff]
        %v529 = vld [vmem:[%s517 + $0x58] sm:$0xff]
        %v530 = vld [vmem:[%s517 + $0x60] sm:$0xff]
        %v531 = vld [vmem:[%s517 + $0x68] sm:$0xff]
        %v532 = vld [vmem:[%s517 + $0x70] sm:$0xff]
        %v533 = vld [vmem:[%s517 + $0x78] sm:$0xff]
        %v534 = vld [vmem:[%s517 + $0x80] sm:$0xff]
        %v535 = vld [vmem:[%s517 + $0x88] sm:$0xff]
        %v536 = vpack.c.bf16 %v519, %v518
        %v537 = vpack.c.bf16 %v521, %v520
        %v538 = vpack.c.bf16 %v523, %v522
        %v539 = vpack.c.bf16 %v525, %v524
        %v540 = vpack.c.bf16 %v527, %v526
        %v541 = vpack.c.bf16 %v529, %v528
        %v542 = vpack.c.bf16 %v531, %v530
        %v543 = vpack.c.bf16 %v533, %v532
        %v544 = vpack.c.bf16 %v535, %v534
        %v545 = vld [vmem:[%s1] sm:$0xf]
        %v546 = vld [vmem:[%s2] sm:$0x1]
        %v548 = vperm.slane %v546, 0
        %vm550 = vcmask 64512
        %v552 = vsel %vm550, %v536, 0
        %v555 = vsel %vm550, %v537, 0
        %v558 = vsel %vm550, %v538, 0
        %v561 = vsel %vm550, %v539, 0
        %v564 = vsel %vm550, %v540, 0
        %v567 = vsel %vm550, %v541, 0
        %v570 = vsel %vm550, %v542, 0
        %v573 = vsel %vm550, %v543, 0
        %v576 = vsel %vm550, %v544, 0
        %vm578 = vcmask 1043456
        %v580 = vsel %vm578, %v545, 0
        %582 = vmatpush.bf16.msra.mxu0 0
        %583 = vmatpush.bf16.msra.mxu0 0
        %584 = vmatpush.bf16.msra.mxu0 0
        %585 = vmatpush.bf16.msra.mxu0 0
        %586 = vmatpush.bf16.msra.mxu0 0
        %587 = vmatpush.bf16.msra.mxu0 0
        %588 = vmatpush.bf16.msra.mxu0 0
        %589 = vmatpush.bf16.msra.mxu0 %v580
        %590 = vmatmul.bf16.gmra.mxu0 %v552
        %v591 = vpop.f32.mrf.mxu0
        %v592 = vadd.f32 %v548, %v591
        %v593 = vpop.f32.mrf.mxu0
        %v594 = vadd.f32 %v548, %v593
        %595 = vmatmul.bf16.gmra.mxu0 %v555
        %v596 = vpop.f32.mrf.mxu0
        %v597 = vadd.f32 %v548, %v596
        %v598 = vpop.f32.mrf.mxu0
        %v599 = vadd.f32 %v548, %v598
        %600 = vmatmul.bf16.gmra.mxu0 %v558
        %v601 = vpop.f32.mrf.mxu0
        %v602 = vadd.f32 %v548, %v601
        %v603 = vpop.f32.mrf.mxu0
        %v604 = vadd.f32 %v548, %v603
        %605 = vmatmul.bf16.gmra.mxu0 %v561
        %v606 = vpop.f32.mrf.mxu0
        %v607 = vadd.f32 %v548, %v606
        %v608 = vpop.f32.mrf.mxu0
        %v609 = vadd.f32 %v548, %v608
        %610 = vmatmul.bf16.gmra.mxu0 %v564
        %v611 = vpop.f32.mrf.mxu0
        %v612 = vadd.f32 %v548, %v611
        %v613 = vpop.f32.mrf.mxu0
        %v614 = vadd.f32 %v548, %v613
        %615 = vmatmul.bf16.gmra.mxu0 %v567
        %v616 = vpop.f32.mrf.mxu0
        %v617 = vadd.f32 %v548, %v616
        %v618 = vpop.f32.mrf.mxu0
        %v619 = vadd.f32 %v548, %v618
        %620 = vmatmul.bf16.gmra.mxu0 %v570
        %v621 = vpop.f32.mrf.mxu0
        %v622 = vadd.f32 %v548, %v621
        %v623 = vpop.f32.mrf.mxu0
        %v624 = vadd.f32 %v548, %v623
        %625 = vmatmul.bf16.gmra.mxu0 %v573
        %v626 = vpop.f32.mrf.mxu0
        %v627 = vadd.f32 %v548, %v626
        %v628 = vpop.f32.mrf.mxu0
        %v629 = vadd.f32 %v548, %v628
        %630 = vmatmul.bf16.gmra.mxu0 %v576
        %v631 = vpop.f32.mrf.mxu0
        %v632 = vadd.f32 %v548, %v631
        %v633 = vpop.f32.mrf.mxu0
        %v634 = vadd.f32 %v548, %v633
        %635 = vdwg.mxu0
        %v636 = vmax.f32 %v592, 0.0
        %v637 = vmax.f32 %v594, 0.0
        %v638 = vmax.f32 %v597, 0.0
        %v639 = vmax.f32 %v599, 0.0
        %v640 = vmax.f32 %v602, 0.0
        %v641 = vmax.f32 %v604, 0.0
        %v642 = vmax.f32 %v607, 0.0
        %v643 = vmax.f32 %v609, 0.0
        %v644 = vmax.f32 %v612, 0.0
        %v645 = vmax.f32 %v614, 0.0
        %v646 = vmax.f32 %v617, 0.0
        %v647 = vmax.f32 %v619, 0.0
        %v648 = vmax.f32 %v622, 0.0
        %v649 = vmax.f32 %v624, 0.0
        %v650 = vmax.f32 %v627, 0.0
        %v651 = vmax.f32 %v629, 0.0
        %v652 = vmax.f32 %v632, 0.0
        %v653 = vmax.f32 %v634, 0.0
        %v654 = vmin.f32 %v636, 6.0
        %v655 = vmin.f32 %v637, 6.0
        %v656 = vmin.f32 %v638, 6.0
        %v657 = vmin.f32 %v639, 6.0
        %v658 = vmin.f32 %v640, 6.0
        %v659 = vmin.f32 %v641, 6.0
        %v660 = vmin.f32 %v642, 6.0
        %v661 = vmin.f32 %v643, 6.0
        %v662 = vmin.f32 %v644, 6.0
        %v663 = vmin.f32 %v645, 6.0
        %v664 = vmin.f32 %v646, 6.0
        %v665 = vmin.f32 %v647, 6.0
        %v666 = vmin.f32 %v648, 6.0
        %v667 = vmin.f32 %v649, 6.0
        %v668 = vmin.f32 %v650, 6.0
        %v669 = vmin.f32 %v651, 6.0
        %v670 = vmin.f32 %v652, 6.0
        %v671 = vmin.f32 %v653, 6.0
        %s672 = scalar_lea.vmem [#allocation2], 360
        %vm673 = vcmask 392192
        %674 = vst.msk [vmem:[%s672 + $0xf] sm:$0xff] %vm673, 0.0
        %675 = vst.msk [vmem:[%s672 + $0x17] sm:$0xff] %vm673, 0.0
        %vm676 = vcmask 386048
        %677 = vst.msk [vmem:[%s672 + $0x1f] sm:$0x3] %vm676, 0.0
        %678 = vst.msk [vmem:[#allocation2 + $0x10] sm:$0xff] %vm673, %v654
        %679 = vst.msk [vmem:[#allocation2 + $0x18] sm:$0xff] %vm673, %v655
        %680 = vst.msk [vmem:[#allocation2 + $0x38] sm:$0xff] %vm673, %v656
        %681 = vst.msk [vmem:[#allocation2 + $0x40] sm:$0xff] %vm673, %v657
        %682 = vst.msk [vmem:[#allocation2 + $0x60] sm:$0xff] %vm673, %v658
        %683 = vst.msk [vmem:[#allocation2 + $0x68] sm:$0xff] %vm673, %v659
        %684 = vst.msk [vmem:[#allocation2 + $0x88] sm:$0xff] %vm673, %v660
        %685 = vst.msk [vmem:[#allocation2 + $0x90] sm:$0xff] %vm673, %v661
        %686 = vst.msk [vmem:[#allocation2 + $0xb0] sm:$0xff] %vm673, %v662
        %687 = vst.msk [vmem:[#allocation2 + $0xb8] sm:$0xff] %vm673, %v663
        %688 = vst.msk [vmem:[#allocation2 + $0xd8] sm:$0xff] %vm673, %v664
        %689 = vst.msk [vmem:[#allocation2 + $0xe0] sm:$0xff] %vm673, %v665
        %690 = vst.msk [vmem:[#allocation2 + $0x100] sm:$0xff] %vm673, %v666
        %691 = vst.msk [vmem:[#allocation2 + $0x108] sm:$0xff] %vm673, %v667
        %692 = vst.msk [vmem:[#allocation2 + $0x128] sm:$0xff] %vm673, %v668
        %693 = vst.msk [vmem:[#allocation2 + $0x130] sm:$0xff] %vm673, %v669
        %694 = vst.msk [vmem:[#allocation2 + $0x150] sm:$0xff] %vm673, %v670
        %695 = vst.msk [vmem:[#allocation2 + $0x158] sm:$0xff] %vm673, %v671
      $region56: #{tpu_custom_call.1} parent=47 // pred_fallthru
        _
      %v696 = vld [vmem:[#allocation2 + $0xf] sm:$0xff]
      %v697 = vld [vmem:[#allocation2 + $0x17] sm:$0xff]
      %v698 = vld [vmem:[#allocation2 + $0x37] sm:$0xff]
      %v699 = vld [vmem:[#allocation2 + $0x3f] sm:$0xff]
      %v700 = vld [vmem:[#allocation2 + $0x5f] sm:$0xff]
      %v701 = vld [vmem:[#allocation2 + $0x67] sm:$0xff]
      %v702 = vld [vmem:[#allocation2 + $0x87] sm:$0xff]
      %v703 = vld [vmem:[#allocation2 + $0x8f] sm:$0xff]
      %v704 = vld [vmem:[#allocation2 + $0xaf] sm:$0xff]
      %v705 = vld [vmem:[#allocation2 + $0xb7] sm:$0xff]
      %v706 = vld [vmem:[#allocation2 + $0xd7] sm:$0xff]
      %v707 = vld [vmem:[#allocation2 + $0xdf] sm:$0xff]
      %v708 = vld [vmem:[#allocation2 + $0xff] sm:$0xff]
      %v709 = vld [vmem:[#allocation2 + $0x107] sm:$0xff]
      %v710 = vld [vmem:[#allocation2 + $0x127] sm:$0xff]
      %v711 = vld [vmem:[#allocation2 + $0x12f] sm:$0xff]
      %v712 = vld [vmem:[%s3] sm:$0x1]
      %v713 = vperm.slane %v712, 0
      %v714 = vmul.f32 %v696, %v713
      %v715 = vmul.f32 %v697, %v713
      %v716 = vmul.f32 %v698, %v713
      %v717 = vmul.f32 %v699, %v713
      %v718 = vmul.f32 %v700, %v713
      %v719 = vmul.f32 %v701, %v713
      %v720 = vmul.f32 %v702, %v713
      %v721 = vmul.f32 %v703, %v713
      %v722 = vmul.f32 %v704, %v713
      %v723 = vmul.f32 %v705, %v713
      %v724 = vmul.f32 %v706, %v713
      %v725 = vmul.f32 %v707, %v713
      %v726 = vmul.f32 %v708, %v713
      %v727 = vmul.f32 %v709, %v713
      %v728 = vmul.f32 %v710, %v713
      %v729 = vmul.f32 %v711, %v713
      %v730 = vadd.f32 %v714, 0.0
      %v731 = vadd.f32 %v715, 0.0
      %v732 = vadd.f32 %v716, 0.0
      %v733 = vadd.f32 %v717, 0.0
      %v734 = vadd.f32 %v718, 0.0
      %v735 = vadd.f32 %v719, 0.0
      %v736 = vadd.f32 %v720, 0.0
      %v737 = vadd.f32 %v721, 0.0
      %v738 = vadd.f32 %v722, 0.0
      %v739 = vadd.f32 %v723, 0.0
      %v740 = vadd.f32 %v724, 0.0
      %v741 = vadd.f32 %v725, 0.0
      %v742 = vadd.f32 %v726, 0.0
      %v743 = vadd.f32 %v727, 0.0
      %v744 = vadd.f32 %v728, 0.0
      %v745 = vadd.f32 %v729, 0.0
      %v746 = vld [vmem:[#allocation2 + $0x10] sm:$0xff]
      %v747 = vld [vmem:[#allocation2 + $0x18] sm:$0xff]
      %v748 = vld [vmem:[#allocation2 + $0x38] sm:$0xff]
      %v749 = vld [vmem:[#allocation2 + $0x40] sm:$0xff]
      %v750 = vld [vmem:[#allocation2 + $0x60] sm:$0xff]
      %v751 = vld [vmem:[#allocation2 + $0x68] sm:$0xff]
      %v752 = vld [vmem:[#allocation2 + $0x88] sm:$0xff]
      %v753 = vld [vmem:[#allocation2 + $0x90] sm:$0xff]
      %v754 = vld [vmem:[#allocation2 + $0xb0] sm:$0xff]
      %v755 = vld [vmem:[#allocation2 + $0xb8] sm:$0xff]
      %v756 = vld [vmem:[#allocation2 + $0xd8] sm:$0xff]
      %v757 = vld [vmem:[#allocation2 + $0xe0] sm:$0xff]
      %v758 = vld [vmem:[#allocation2 + $0x100] sm:$0xff]
      %v759 = vld [vmem:[#allocation2 + $0x108] sm:$0xff]
      %v760 = vld [vmem:[#allocation2 + $0x128] sm:$0xff]
      %v761 = vld [vmem:[#allocation2 + $0x130] sm:$0xff]
      %v762 = vld [vmem:[%s3 + $0x1] sm:$0x1]
      %v763 = vperm.slane %v762, 0
      %v764 = vmul.f32 %v746, %v763
      %v765 = vmul.f32 %v747, %v763
      %v766 = vmul.f32 %v748, %v763
      %v767 = vmul.f32 %v749, %v763
      %v768 = vmul.f32 %v750, %v763
      %v769 = vmul.f32 %v751, %v763
      %v770 = vmul.f32 %v752, %v763
      %v771 = vmul.f32 %v753, %v763
      %v772 = vmul.f32 %v754, %v763
      %v773 = vmul.f32 %v755, %v763
      %v774 = vmul.f32 %v756, %v763
      %v775 = vmul.f32 %v757, %v763
      %v776 = vmul.f32 %v758, %v763
      %v777 = vmul.f32 %v759, %v763
      %v778 = vmul.f32 %v760, %v763
      %v779 = vmul.f32 %v761, %v763
      %v780 = vadd.f32 %v730, %v764
      %v781 = vadd.f32 %v731, %v765
      %v782 = vadd.f32 %v732, %v766
      %v783 = vadd.f32 %v733, %v767
      %v784 = vadd.f32 %v734, %v768
      %v785 = vadd.f32 %v735, %v769
      %v786 = vadd.f32 %v736, %v770
      %v787 = vadd.f32 %v737, %v771
      %v788 = vadd.f32 %v738, %v772
      %v789 = vadd.f32 %v739, %v773
      %v790 = vadd.f32 %v740, %v774
      %v791 = vadd.f32 %v741, %v775
      %v792 = vadd.f32 %v742, %v776
      %v793 = vadd.f32 %v743, %v777
      %v794 = vadd.f32 %v744, %v778
      %v795 = vadd.f32 %v745, %v779
      %v796 = vld [vmem:[#allocation2 + $0x11] sm:$0xff]
      %v797 = vld [vmem:[#allocation2 + $0x19] sm:$0xff]
      %v798 = vld [vmem:[#allocation2 + $0x39] sm:$0xff]
      %v799 = vld [vmem:[#allocation2 + $0x41] sm:$0xff]
      %v800 = vld [vmem:[#allocation2 + $0x61] sm:$0xff]
      %v801 = vld [vmem:[#allocation2 + $0x69] sm:$0xff]
      %v802 = vld [vmem:[#allocation2 + $0x89] sm:$0xff]
      %v803 = vld [vmem:[#allocation2 + $0x91] sm:$0xff]
      %v804 = vld [vmem:[#allocation2 + $0xb1] sm:$0xff]
      %v805 = vld [vmem:[#allocation2 + $0xb9] sm:$0xff]
      %v806 = vld [vmem:[#allocation2 + $0xd9] sm:$0xff]
      %v807 = vld [vmem:[#allocation2 + $0xe1] sm:$0xff]
      %v808 = vld [vmem:[#allocation2 + $0x101] sm:$0xff]
      %v809 = vld [vmem:[#allocation2 + $0x109] sm:$0xff]
      %v810 = vld [vmem:[#allocation2 + $0x129] sm:$0xff]
      %v811 = vld [vmem:[#allocation2 + $0x131] sm:$0xff]
      %v812 = vld [vmem:[%s3 + $0x2] sm:$0x1]
      %v813 = vperm.slane %v812, 0
      %v814 = vmul.f32 %v796, %v813
      %v815 = vmul.f32 %v797, %v813
      %v816 = vmul.f32 %v798, %v813
      %v817 = vmul.f32 %v799, %v813
      %v818 = vmul.f32 %v800, %v813
      %v819 = vmul.f32 %v801, %v813
      %v820 = vmul.f32 %v802, %v813
      %v821 = vmul.f32 %v803, %v813
      %v822 = vmul.f32 %v804, %v813
      %v823 = vmul.f32 %v805, %v813
      %v824 = vmul.f32 %v806, %v813
      %v825 = vmul.f32 %v807, %v813
      %v826 = vmul.f32 %v808, %v813
      %v827 = vmul.f32 %v809, %v813
      %v828 = vmul.f32 %v810, %v813
      %v829 = vmul.f32 %v811, %v813
      %v830 = vadd.f32 %v780, %v814
      %v831 = vadd.f32 %v781, %v815
      %v832 = vadd.f32 %v782, %v816
      %v833 = vadd.f32 %v783, %v817
      %v834 = vadd.f32 %v784, %v818
      %v835 = vadd.f32 %v785, %v819
      %v836 = vadd.f32 %v786, %v820
      %v837 = vadd.f32 %v787, %v821
      %v838 = vadd.f32 %v788, %v822
      %v839 = vadd.f32 %v789, %v823
      %v840 = vadd.f32 %v790, %v824
      %v841 = vadd.f32 %v791, %v825
      %v842 = vadd.f32 %v792, %v826
      %v843 = vadd.f32 %v793, %v827
      %v844 = vadd.f32 %v794, %v828
      %v845 = vadd.f32 %v795, %v829
      %s846 = scalar_lea.vmem [#allocation2], 40
      %v847 = vld [vmem:[%s846 + $0xf] sm:$0xff]
      %v848 = vld [vmem:[%s846 + $0x17] sm:$0xff]
      %v849 = vld [vmem:[%s846 + $0x37] sm:$0xff]
      %v850 = vld [vmem:[%s846 + $0x3f] sm:$0xff]
      %v851 = vld [vmem:[%s846 + $0x5f] sm:$0xff]
      %v852 = vld [vmem:[%s846 + $0x67] sm:$0xff]
      %v853 = vld [vmem:[%s846 + $0x87] sm:$0xff]
      %v854 = vld [vmem:[%s846 + $0x8f] sm:$0xff]
      %v855 = vld [vmem:[%s846 + $0xaf] sm:$0xff]
      %v856 = vld [vmem:[%s846 + $0xb7] sm:$0xff]
      %v857 = vld [vmem:[%s846 + $0xd7] sm:$0xff]
      %v858 = vld [vmem:[%s846 + $0xdf] sm:$0xff]
      %v859 = vld [vmem:[%s846 + $0xff] sm:$0xff]
      %v860 = vld [vmem:[%s846 + $0x107] sm:$0xff]
      %v861 = vld [vmem:[%s846 + $0x127] sm:$0xff]
      %v862 = vld [vmem:[%s846 + $0x12f] sm:$0xff]
      %s863 = scalar_lea.vmem %s3, 4
      %v864 = vld [vmem:[%s863] sm:$0x1]
      %v865 = vperm.slane %v864, 0
      %v866 = vmul.f32 %v847, %v865
      %v867 = vmul.f32 %v848, %v865
      %v868 = vmul.f32 %v849, %v865
      %v869 = vmul.f32 %v850, %v865
      %v870 = vmul.f32 %v851, %v865
      %v871 = vmul.f32 %v852, %v865
      %v872 = vmul.f32 %v853, %v865
      %v873 = vmul.f32 %v854, %v865
      %v874 = vmul.f32 %v855, %v865
      %v875 = vmul.f32 %v856, %v865
      %v876 = vmul.f32 %v857, %v865
      %v877 = vmul.f32 %v858, %v865
      %v878 = vmul.f32 %v859, %v865
      %v879 = vmul.f32 %v860, %v865
      %v880 = vmul.f32 %v861, %v865
      %v881 = vmul.f32 %v862, %v865
      %v882 = vadd.f32 %v830, %v866
      %v883 = vadd.f32 %v831, %v867
      %v884 = vadd.f32 %v832, %v868
      %v885 = vadd.f32 %v833, %v869
      %v886 = vadd.f32 %v834, %v870
      %v887 = vadd.f32 %v835, %v871
      %v888 = vadd.f32 %v836, %v872
      %v889 = vadd.f32 %v837, %v873
      %v890 = vadd.f32 %v838, %v874
      %v891 = vadd.f32 %v839, %v875
      %v892 = vadd.f32 %v840, %v876
      %v893 = vadd.f32 %v841, %v877
      %v894 = vadd.f32 %v842, %v878
      %v895 = vadd.f32 %v843, %v879
      %v896 = vadd.f32 %v844, %v880
      %v897 = vadd.f32 %v845, %v881
      %v898 = vld [vmem:[%s846 + $0x10] sm:$0xff]
      %v899 = vld [vmem:[%s846 + $0x18] sm:$0xff]
      %v900 = vld [vmem:[%s846 + $0x38] sm:$0xff]
      %v901 = vld [vmem:[%s846 + $0x40] sm:$0xff]
      %v902 = vld [vmem:[%s846 + $0x60] sm:$0xff]
      %v903 = vld [vmem:[%s846 + $0x68] sm:$0xff]
      %v904 = vld [vmem:[%s846 + $0x88] sm:$0xff]
      %v905 = vld [vmem:[%s846 + $0x90] sm:$0xff]
      %v906 = vld [vmem:[%s846 + $0xb0] sm:$0xff]
      %v907 = vld [vmem:[%s846 + $0xb8] sm:$0xff]
      %v908 = vld [vmem:[%s846 + $0xd8] sm:$0xff]
      %v909 = vld [vmem:[%s846 + $0xe0] sm:$0xff]
      %v910 = vld [vmem:[%s846 + $0x100] sm:$0xff]
      %v911 = vld [vmem:[%s846 + $0x108] sm:$0xff]
      %v912 = vld [vmem:[%s846 + $0x128] sm:$0xff]
      %v913 = vld [vmem:[%s846 + $0x130] sm:$0xff]
      %v914 = vld [vmem:[%s863 + $0x1] sm:$0x1]
      %v915 = vperm.slane %v914, 0
      %v916 = vmul.f32 %v898, %v915
      %v917 = vmul.f32 %v899, %v915
      %v918 = vmul.f32 %v900, %v915
      %v919 = vmul.f32 %v901, %v915
      %v920 = vmul.f32 %v902, %v915
      %v921 = vmul.f32 %v903, %v915
      %v922 = vmul.f32 %v904, %v915
      %v923 = vmul.f32 %v905, %v915
      %v924 = vmul.f32 %v906, %v915
      %v925 = vmul.f32 %v907, %v915
      %v926 = vmul.f32 %v908, %v915
      %v927 = vmul.f32 %v909, %v915
      %v928 = vmul.f32 %v910, %v915
      %v929 = vmul.f32 %v911, %v915
      %v930 = vmul.f32 %v912, %v915
      %v931 = vmul.f32 %v913, %v915
      %v932 = vadd.f32 %v882, %v916
      %v933 = vadd.f32 %v883, %v917
      %v934 = vadd.f32 %v884, %v918
      %v935 = vadd.f32 %v885, %v919
      %v936 = vadd.f32 %v886, %v920
      %v937 = vadd.f32 %v887, %v921
      %v938 = vadd.f32 %v888, %v922
      %v939 = vadd.f32 %v889, %v923
      %v940 = vadd.f32 %v890, %v924
      %v941 = vadd.f32 %v891, %v925
      %v942 = vadd.f32 %v892, %v926
      %v943 = vadd.f32 %v893, %v927
      %v944 = vadd.f32 %v894, %v928
      %v945 = vadd.f32 %v895, %v929
      %v946 = vadd.f32 %v896, %v930
      %v947 = vadd.f32 %v897, %v931
      %v948 = vld [vmem:[%s846 + $0x11] sm:$0xff]
      %v949 = vld [vmem:[%s846 + $0x19] sm:$0xff]
      %v950 = vld [vmem:[%s846 + $0x39] sm:$0xff]
      %v951 = vld [vmem:[%s846 + $0x41] sm:$0xff]
      %v952 = vld [vmem:[%s846 + $0x61] sm:$0xff]
      %v953 = vld [vmem:[%s846 + $0x69] sm:$0xff]
      %v954 = vld [vmem:[%s846 + $0x89] sm:$0xff]
      %v955 = vld [vmem:[%s846 + $0x91] sm:$0xff]
      %v956 = vld [vmem:[%s846 + $0xb1] sm:$0xff]
      %v957 = vld [vmem:[%s846 + $0xb9] sm:$0xff]
      %v958 = vld [vmem:[%s846 + $0xd9] sm:$0xff]
      %v959 = vld [vmem:[%s846 + $0xe1] sm:$0xff]
      %v960 = vld [vmem:[%s846 + $0x101] sm:$0xff]
      %v961 = vld [vmem:[%s846 + $0x109] sm:$0xff]
      %v962 = vld [vmem:[%s846 + $0x129] sm:$0xff]
      %v963 = vld [vmem:[%s846 + $0x131] sm:$0xff]
      %v964 = vld [vmem:[%s863 + $0x2] sm:$0x1]
      %v965 = vperm.slane %v964, 0
      %v966 = vmul.f32 %v948, %v965
      %v967 = vmul.f32 %v949, %v965
      %v968 = vmul.f32 %v950, %v965
      %v969 = vmul.f32 %v951, %v965
      %v970 = vmul.f32 %v952, %v965
      %v971 = vmul.f32 %v953, %v965
      %v972 = vmul.f32 %v954, %v965
      %v973 = vmul.f32 %v955, %v965
      %v974 = vmul.f32 %v956, %v965
      %v975 = vmul.f32 %v957, %v965
      %v976 = vmul.f32 %v958, %v965
      %v977 = vmul.f32 %v959, %v965
      %v978 = vmul.f32 %v960, %v965
      %v979 = vmul.f32 %v961, %v965
      %v980 = vmul.f32 %v962, %v965
      %v981 = vmul.f32 %v963, %v965
      %v982 = vadd.f32 %v932, %v966
      %v983 = vadd.f32 %v933, %v967
      %v984 = vadd.f32 %v934, %v968
      %v985 = vadd.f32 %v935, %v969
      %v986 = vadd.f32 %v936, %v970
      %v987 = vadd.f32 %v937, %v971
      %v988 = vadd.f32 %v938, %v972
      %v989 = vadd.f32 %v939, %v973
      %v990 = vadd.f32 %v940, %v974
      %v991 = vadd.f32 %v941, %v975
      %v992 = vadd.f32 %v942, %v976
      %v993 = vadd.f32 %v943, %v977
      %v994 = vadd.f32 %v944, %v978
      %v995 = vadd.f32 %v945, %v979
      %v996 = vadd.f32 %v946, %v980
      %v997 = vadd.f32 %v947, %v981
      %s998 = scalar_lea.vmem [#allocation2], 80
      %v999 = vld [vmem:[%s998 + $0xf] sm:$0xff]
      %v1000 = vld [vmem:[%s998 + $0x17] sm:$0xff]
      %v1001 = vld [vmem:[%s998 + $0x37] sm:$0xff]
      %v1002 = vld [vmem:[%s998 + $0x3f] sm:$0xff]
      %v1003 = vld [vmem:[%s998 + $0x5f] sm:$0xff]
      %v1004 = vld [vmem:[%s998 + $0x67] sm:$0xff]
      %v1005 = vld [vmem:[%s998 + $0x87] sm:$0xff]
      %v1006 = vld [vmem:[%s998 + $0x8f] sm:$0xff]
      %v1007 = vld [vmem:[%s998 + $0xaf] sm:$0xff]
      %v1008 = vld [vmem:[%s998 + $0xb7] sm:$0xff]
      %v1009 = vld [vmem:[%s998 + $0xd7] sm:$0xff]
      %v1010 = vld [vmem:[%s998 + $0xdf] sm:$0xff]
      %v1011 = vld [vmem:[%s998 + $0xff] sm:$0xff]
      %v1012 = vld [vmem:[%s998 + $0x107] sm:$0xff]
      %v1013 = vld [vmem:[%s998 + $0x127] sm:$0xff]
      %v1014 = vld [vmem:[%s998 + $0x12f] sm:$0xff]
      %s1015 = scalar_lea.vmem %s3, 8
      %v1016 = vld [vmem:[%s1015] sm:$0x1]
      %v1017 = vperm.slane %v1016, 0
      %v1018 = vmul.f32 %v999, %v1017
      %v1019 = vmul.f32 %v1000, %v1017
      %v1020 = vmul.f32 %v1001, %v1017
      %v1021 = vmul.f32 %v1002, %v1017
      %v1022 = vmul.f32 %v1003, %v1017
      %v1023 = vmul.f32 %v1004, %v1017
      %v1024 = vmul.f32 %v1005, %v1017
      %v1025 = vmul.f32 %v1006, %v1017
      %v1026 = vmul.f32 %v1007, %v1017
      %v1027 = vmul.f32 %v1008, %v1017
      %v1028 = vmul.f32 %v1009, %v1017
      %v1029 = vmul.f32 %v1010, %v1017
      %v1030 = vmul.f32 %v1011, %v1017
      %v1031 = vmul.f32 %v1012, %v1017
      %v1032 = vmul.f32 %v1013, %v1017
      %v1033 = vmul.f32 %v1014, %v1017
      %v1034 = vadd.f32 %v982, %v1018
      %v1035 = vadd.f32 %v983, %v1019
      %v1036 = vadd.f32 %v984, %v1020
      %v1037 = vadd.f32 %v985, %v1021
      %v1038 = vadd.f32 %v986, %v1022
      %v1039 = vadd.f32 %v987, %v1023
      %v1040 = vadd.f32 %v988, %v1024
      %v1041 = vadd.f32 %v989, %v1025
      %v1042 = vadd.f32 %v990, %v1026
      %v1043 = vadd.f32 %v991, %v1027
      %v1044 = vadd.f32 %v992, %v1028
      %v1045 = vadd.f32 %v993, %v1029
      %v1046 = vadd.f32 %v994, %v1030
      %v1047 = vadd.f32 %v995, %v1031
      %v1048 = vadd.f32 %v996, %v1032
      %v1049 = vadd.f32 %v997, %v1033
      %v1050 = vld [vmem:[%s998 + $0x10] sm:$0xff]
      %v1051 = vld [vmem:[%s998 + $0x18] sm:$0xff]
      %v1052 = vld [vmem:[%s998 + $0x38] sm:$0xff]
      %v1053 = vld [vmem:[%s998 + $0x40] sm:$0xff]
      %v1054 = vld [vmem:[%s998 + $0x60] sm:$0xff]
      %v1055 = vld [vmem:[%s998 + $0x68] sm:$0xff]
      %v1056 = vld [vmem:[%s998 + $0x88] sm:$0xff]
      %v1057 = vld [vmem:[%s998 + $0x90] sm:$0xff]
      %v1058 = vld [vmem:[%s998 + $0xb0] sm:$0xff]
      %v1059 = vld [vmem:[%s998 + $0xb8] sm:$0xff]
      %v1060 = vld [vmem:[%s998 + $0xd8] sm:$0xff]
      %v1061 = vld [vmem:[%s998 + $0xe0] sm:$0xff]
      %v1062 = vld [vmem:[%s998 + $0x100] sm:$0xff]
      %v1063 = vld [vmem:[%s998 + $0x108] sm:$0xff]
      %v1064 = vld [vmem:[%s998 + $0x128] sm:$0xff]
      %v1065 = vld [vmem:[%s998 + $0x130] sm:$0xff]
      %v1066 = vld [vmem:[%s1015 + $0x1] sm:$0x1]
      %v1067 = vperm.slane %v1066, 0
      %v1068 = vmul.f32 %v1050, %v1067
      %v1069 = vmul.f32 %v1051, %v1067
      %v1070 = vmul.f32 %v1052, %v1067
      %v1071 = vmul.f32 %v1053, %v1067
      %v1072 = vmul.f32 %v1054, %v1067
      %v1073 = vmul.f32 %v1055, %v1067
      %v1074 = vmul.f32 %v1056, %v1067
      %v1075 = vmul.f32 %v1057, %v1067
      %v1076 = vmul.f32 %v1058, %v1067
      %v1077 = vmul.f32 %v1059, %v1067
      %v1078 = vmul.f32 %v1060, %v1067
      %v1079 = vmul.f32 %v1061, %v1067
      %v1080 = vmul.f32 %v1062, %v1067
      %v1081 = vmul.f32 %v1063, %v1067
      %v1082 = vmul.f32 %v1064, %v1067
      %v1083 = vmul.f32 %v1065, %v1067
      %v1084 = vadd.f32 %v1034, %v1068
      %v1085 = vadd.f32 %v1035, %v1069
      %v1086 = vadd.f32 %v1036, %v1070
      %v1087 = vadd.f32 %v1037, %v1071
      %v1088 = vadd.f32 %v1038, %v1072
      %v1089 = vadd.f32 %v1039, %v1073
      %v1090 = vadd.f32 %v1040, %v1074
      %v1091 = vadd.f32 %v1041, %v1075
      %v1092 = vadd.f32 %v1042, %v1076
      %v1093 = vadd.f32 %v1043, %v1077
      %v1094 = vadd.f32 %v1044, %v1078
      %v1095 = vadd.f32 %v1045, %v1079
      %v1096 = vadd.f32 %v1046, %v1080
      %v1097 = vadd.f32 %v1047, %v1081
      %v1098 = vadd.f32 %v1048, %v1082
      %v1099 = vadd.f32 %v1049, %v1083
      %v1100 = vld [vmem:[%s998 + $0x11] sm:$0xff]
      %v1101 = vld [vmem:[%s998 + $0x19] sm:$0xff]
      %v1102 = vld [vmem:[%s998 + $0x39] sm:$0xff]
      %v1103 = vld [vmem:[%s998 + $0x41] sm:$0xff]
      %v1104 = vld [vmem:[%s998 + $0x61] sm:$0xff]
      %v1105 = vld [vmem:[%s998 + $0x69] sm:$0xff]
      %v1106 = vld [vmem:[%s998 + $0x89] sm:$0xff]
      %v1107 = vld [vmem:[%s998 + $0x91] sm:$0xff]
      %v1108 = vld [vmem:[%s998 + $0xb1] sm:$0xff]
      %v1109 = vld [vmem:[%s998 + $0xb9] sm:$0xff]
      %v1110 = vld [vmem:[%s998 + $0xd9] sm:$0xff]
      %v1111 = vld [vmem:[%s998 + $0xe1] sm:$0xff]
      %v1112 = vld [vmem:[%s998 + $0x101] sm:$0xff]
      %v1113 = vld [vmem:[%s998 + $0x109] sm:$0xff]
      %v1114 = vld [vmem:[%s998 + $0x129] sm:$0xff]
      %v1115 = vld [vmem:[%s998 + $0x131] sm:$0xff]
      %v1116 = vld [vmem:[%s1015 + $0x2] sm:$0x1]
      %v1117 = vperm.slane %v1116, 0
      %v1118 = vmul.f32 %v1100, %v1117
      %v1119 = vmul.f32 %v1101, %v1117
      %v1120 = vmul.f32 %v1102, %v1117
      %v1121 = vmul.f32 %v1103, %v1117
      %v1122 = vmul.f32 %v1104, %v1117
      %v1123 = vmul.f32 %v1105, %v1117
      %v1124 = vmul.f32 %v1106, %v1117
      %v1125 = vmul.f32 %v1107, %v1117
      %v1126 = vmul.f32 %v1108, %v1117
      %v1127 = vmul.f32 %v1109, %v1117
      %v1128 = vmul.f32 %v1110, %v1117
      %v1129 = vmul.f32 %v1111, %v1117
      %v1130 = vmul.f32 %v1112, %v1117
      %v1131 = vmul.f32 %v1113, %v1117
      %v1132 = vmul.f32 %v1114, %v1117
      %v1133 = vmul.f32 %v1115, %v1117
      %v1134 = vadd.f32 %v1084, %v1118
      %v1135 = vadd.f32 %v1085, %v1119
      %v1136 = vadd.f32 %v1086, %v1120
      %v1137 = vadd.f32 %v1087, %v1121
      %v1138 = vadd.f32 %v1088, %v1122
      %v1139 = vadd.f32 %v1089, %v1123
      %v1140 = vadd.f32 %v1090, %v1124
      %v1141 = vadd.f32 %v1091, %v1125
      %v1142 = vadd.f32 %v1092, %v1126
      %v1143 = vadd.f32 %v1093, %v1127
      %v1144 = vadd.f32 %v1094, %v1128
      %v1145 = vadd.f32 %v1095, %v1129
      %v1146 = vadd.f32 %v1096, %v1130
      %v1147 = vadd.f32 %v1097, %v1131
      %v1148 = vadd.f32 %v1098, %v1132
      %v1149 = vadd.f32 %v1099, %v1133
      %v1150 = vld [vmem:[%s4] sm:$0x1]
      %v1152 = vperm.slane %v1150, 0
      %v1154 = vadd.f32 %v1134, %v1152
      %v1155 = vadd.f32 %v1135, %v1152
      %v1156 = vadd.f32 %v1136, %v1152
      %v1157 = vadd.f32 %v1137, %v1152
      %v1158 = vadd.f32 %v1138, %v1152
      %v1159 = vadd.f32 %v1139, %v1152
      %v1160 = vadd.f32 %v1140, %v1152
      %v1161 = vadd.f32 %v1141, %v1152
      %v1162 = vadd.f32 %v1142, %v1152
      %v1163 = vadd.f32 %v1143, %v1152
      %v1164 = vadd.f32 %v1144, %v1152
      %v1165 = vadd.f32 %v1145, %v1152
      %v1166 = vadd.f32 %v1146, %v1152
      %v1167 = vadd.f32 %v1147, %v1152
      %v1168 = vadd.f32 %v1148, %v1152
      %v1169 = vadd.f32 %v1149, %v1152
      %v1170 = vmax.f32 %v1154, 0.0
      %v1171 = vmax.f32 %v1155, 0.0
      %v1172 = vmax.f32 %v1156, 0.0
      %v1173 = vmax.f32 %v1157, 0.0
      %v1174 = vmax.f32 %v1158, 0.0
      %v1175 = vmax.f32 %v1159, 0.0
      %v1176 = vmax.f32 %v1160, 0.0
      %v1177 = vmax.f32 %v1161, 0.0
      %v1178 = vmax.f32 %v1162, 0.0
      %v1179 = vmax.f32 %v1163, 0.0
      %v1180 = vmax.f32 %v1164, 0.0
      %v1181 = vmax.f32 %v1165, 0.0
      %v1182 = vmax.f32 %v1166, 0.0
      %v1183 = vmax.f32 %v1167, 0.0
      %v1184 = vmax.f32 %v1168, 0.0
      %v1185 = vmax.f32 %v1169, 0.0
      %v1186 = vmin.f32 %v1170, 6.0
      %v1187 = vmin.f32 %v1171, 6.0
      %v1188 = vmin.f32 %v1172, 6.0
      %v1189 = vmin.f32 %v1173, 6.0
      %v1190 = vmin.f32 %v1174, 6.0
      %v1191 = vmin.f32 %v1175, 6.0
      %v1192 = vmin.f32 %v1176, 6.0
      %v1193 = vmin.f32 %v1177, 6.0
      %v1194 = vmin.f32 %v1178, 6.0
      %v1195 = vmin.f32 %v1179, 6.0
      %v1196 = vmin.f32 %v1180, 6.0
      %v1197 = vmin.f32 %v1181, 6.0
      %v1198 = vmin.f32 %v1182, 6.0
      %v1199 = vmin.f32 %v1183, 6.0
      %v1200 = vmin.f32 %v1184, 6.0
      %v1201 = vmin.f32 %v1185, 6.0
      %v1202 = vpack.c.bf16 %v1187, %v1186
      %v1203 = vpack.c.bf16 %v1189, %v1188
      %v1204 = vpack.c.bf16 %v1191, %v1190
      %v1205 = vpack.c.bf16 %v1193, %v1192
      %v1206 = vpack.c.bf16 %v1195, %v1194
      %v1207 = vpack.c.bf16 %v1197, %v1196
      %v1208 = vpack.c.bf16 %v1199, %v1198
      %v1209 = vpack.c.bf16 %v1201, %v1200
      %v1210 = vld [vmem:[%s5] sm:$0xf]
      %v1211 = vld [vmem:[%s5 + $0x4] sm:$0xf]
      %v1212 = vld [vmem:[%s5 + $0x8] sm:$0xf]
      %v1213 = vld [vmem:[%s5 + $0xc] sm:$0xf]
      %v1214 = vld [vmem:[%s5 + $0x10] sm:$0xf]
      %v1215 = vld [vmem:[%s5 + $0x14] sm:$0xf]
      %v1216 = vld [vmem:[%s6] sm:$0x1]
      %v1218 = vperm.slane %v1216, 0
      %v1226 = vunpack.c.l.b16 %v1210
      %v1227 = vunpack.c.l.b16 %v1211
      %v1228 = vunpack.c.l.b16 %v1212
      %v1229 = vunpack.c.l.b16 %v1213
      %v1230 = vunpack.c.l.b16 %v1214
      %v1231 = vunpack.c.l.b16 %v1215
      %v1232 = vpack.c.b16 %v1227, %v1226
      %v1233 = vpack.c.b16 %v1229, %v1228
      %v1234 = vpack.c.b16 %v1231, %v1230
      %vm1238 = vcmask 392192
      %v1240 = vsel %vm1238, %v1202, 0
      %v1243 = vsel %vm1238, %v1203, 0
      %v1246 = vsel %vm1238, %v1204, 0
      %v1249 = vsel %vm1238, %v1205, 0
      %v1252 = vsel %vm1238, %v1206, 0
      %v1255 = vsel %vm1238, %v1207, 0
      %v1258 = vsel %vm1238, %v1208, 0
      %v1261 = vsel %vm1238, %v1209, 0
      %1263 = vmatpush.bf16.msra.mxu0 0
      %1264 = vmatpush.bf16.msra.mxu0 0
      %1265 = vmatpush.bf16.msra.mxu0 0
      %1266 = vmatpush.bf16.msra.mxu0 0
      %1267 = vmatpush.bf16.msra.mxu0 0
      %1268 = vmatpush.bf16.msra.mxu0 %v1234
      %1269 = vmatpush.bf16.msra.mxu0 %v1233
      %1270 = vmatpush.bf16.msra.mxu0 %v1232
      %1271 = vmatmul.bf16.gmra.mxu0 %v1240
      %v1272 = vpop.f32.mrf.mxu0
      %v1273 = vadd.f32 %v1218, %v1272
      %v1274 = vpop.f32.mrf.mxu0
      %v1275 = vadd.f32 %v1218, %v1274
      %1276 = vmatmul.bf16.gmra.mxu0 %v1243
      %v1277 = vpop.f32.mrf.mxu0
      %v1278 = vadd.f32 %v1218, %v1277
      %v1279 = vpop.f32.mrf.mxu0
      %v1280 = vadd.f32 %v1218, %v1279
      %1281 = vmatmul.bf16.gmra.mxu0 %v1246
      %v1282 = vpop.f32.mrf.mxu0
      %v1283 = vadd.f32 %v1218, %v1282
      %v1284 = vpop.f32.mrf.mxu0
      %v1285 = vadd.f32 %v1218, %v1284
      %1286 = vmatmul.bf16.gmra.mxu0 %v1249
      %v1287 = vpop.f32.mrf.mxu0
      %v1288 = vadd.f32 %v1218, %v1287
      %v1289 = vpop.f32.mrf.mxu0
      %v1290 = vadd.f32 %v1218, %v1289
      %1291 = vmatmul.bf16.gmra.mxu0 %v1252
      %v1292 = vpop.f32.mrf.mxu0
      %v1293 = vadd.f32 %v1218, %v1292
      %v1294 = vpop.f32.mrf.mxu0
      %v1295 = vadd.f32 %v1218, %v1294
      %1296 = vmatmul.bf16.gmra.mxu0 %v1255
      %v1297 = vpop.f32.mrf.mxu0
      %v1298 = vadd.f32 %v1218, %v1297
      %v1299 = vpop.f32.mrf.mxu0
      %v1300 = vadd.f32 %v1218, %v1299
      %1301 = vmatmul.bf16.gmra.mxu0 %v1258
      %v1302 = vpop.f32.mrf.mxu0
      %v1303 = vadd.f32 %v1218, %v1302
      %v1304 = vpop.f32.mrf.mxu0
      %v1305 = vadd.f32 %v1218, %v1304
      %1306 = vmatmul.bf16.gmra.mxu0 %v1261
      %v1307 = vpop.f32.mrf.mxu0
      %v1308 = vadd.f32 %v1218, %v1307
      %v1309 = vpop.f32.mrf.mxu0
      %v1310 = vadd.f32 %v1218, %v1309
      %1311 = vdwg.mxu0
      %s1312 = smul.u32 %s305, 16
      %s1313 = scalar_lea.vmem %s292, %s1312
      %v1314 = vld [vmem:[%s1313] sm:$0xff]
      %v1315 = vld [vmem:[%s1313 + $0x8] sm:$0xff]
      %v1316 = vld [vmem:[%s1313 + $0x10] sm:$0xff]
      %v1317 = vld [vmem:[%s1313 + $0x18] sm:$0xff]
      %v1318 = vld [vmem:[%s1313 + $0x20] sm:$0xff]
      %v1319 = vld [vmem:[%s1313 + $0x28] sm:$0xff]
      %v1320 = vld [vmem:[%s1313 + $0x30] sm:$0xff]
      %v1321 = vld [vmem:[%s1313 + $0x38] sm:$0xff]
      %v1322 = vld [vmem:[%s1313 + $0x40] sm:$0xff]
      %v1323 = vld [vmem:[%s1313 + $0x48] sm:$0xff]
      %v1324 = vld [vmem:[%s1313 + $0x50] sm:$0xff]
      %v1325 = vld [vmem:[%s1313 + $0x58] sm:$0xff]
      %v1326 = vld [vmem:[%s1313 + $0x60] sm:$0xff]
      %v1327 = vld [vmem:[%s1313 + $0x68] sm:$0xff]
      %v1328 = vld [vmem:[%s1313 + $0x70] sm:$0xff]
      %v1329 = vld [vmem:[%s1313 + $0x78] sm:$0xff]
      %v1330 = vadd.f32 %v1273, %v1314
      %v1331 = vadd.f32 %v1275, %v1315
      %v1332 = vadd.f32 %v1278, %v1316
      %v1333 = vadd.f32 %v1280, %v1317
      %v1334 = vadd.f32 %v1283, %v1318
      %v1335 = vadd.f32 %v1285, %v1319
      %v1336 = vadd.f32 %v1288, %v1320
      %v1337 = vadd.f32 %v1290, %v1321
      %v1338 = vadd.f32 %v1293, %v1322
      %v1339 = vadd.f32 %v1295, %v1323
      %v1340 = vadd.f32 %v1298, %v1324
      %v1341 = vadd.f32 %v1300, %v1325
      %v1342 = vadd.f32 %v1303, %v1326
      %v1343 = vadd.f32 %v1305, %v1327
      %v1344 = vadd.f32 %v1308, %v1328
      %v1345 = vadd.f32 %v1310, %v1329
      %vm1346 = vcmask 64512
      %1347 = vst.msk [vmem:[%s302] sm:$0xff] %vm1346, %v1330
      %1348 = vst.msk [vmem:[%s302 + $0x8] sm:$0xff] %vm1346, %v1331
      %1349 = vst.msk [vmem:[%s302 + $0x10] sm:$0xff] %vm1346, %v1332
      %1350 = vst.msk [vmem:[%s302 + $0x18] sm:$0xff] %vm1346, %v1333
      %1351 = vst.msk [vmem:[%s302 + $0x20] sm:$0xff] %vm1346, %v1334
      %1352 = vst.msk [vmem:[%s302 + $0x28] sm:$0xff] %vm1346, %v1335
      %1353 = vst.msk [vmem:[%s302 + $0x30] sm:$0xff] %vm1346, %v1336
      %1354 = vst.msk [vmem:[%s302 + $0x38] sm:$0xff] %vm1346, %v1337
      %1355 = vst.msk [vmem:[%s302 + $0x40] sm:$0xff] %vm1346, %v1338
      %1356 = vst.msk [vmem:[%s302 + $0x48] sm:$0xff] %vm1346, %v1339
      %1357 = vst.msk [vmem:[%s302 + $0x50] sm:$0xff] %vm1346, %v1340
      %1358 = vst.msk [vmem:[%s302 + $0x58] sm:$0xff] %vm1346, %v1341
      %1359 = vst.msk [vmem:[%s302 + $0x60] sm:$0xff] %vm1346, %v1342
      %1360 = vst.msk [vmem:[%s302 + $0x68] sm:$0xff] %vm1346, %v1343
      %1361 = vst.msk [vmem:[%s302 + $0x70] sm:$0xff] %vm1346, %v1344
      %1362 = vst.msk [vmem:[%s302 + $0x78] sm:$0xff] %vm1346, %v1345
      %s1363 = smul.u32 8, %s23
      %p1364 = scmp.lt.s32.totalorder %s22, 1
      %s1365 = scalar_select %p1364, %s22, 1
      %p1366 = scmp.lt.s32.totalorder %s1363, 15
      %s1367 = scalar_select %p1366, %s1363, 15
      %s1368 = smul.addr %s1367, 2
      %s1369 = smul.addr %s1365, 32
      %s1370 = sadd.s32 %s1368, %s1369
      %s1371 = smul.addr %s1370, 8
      %s1372 = scalar_lea.vmem %s7, %s1371
      // Predicated region
      $region57: #{tpu_custom_call.1} parent=47 // pred_check
        %p1373 = pneg %p202
      $region58: #{tpu_custom_call.1} parent=47 // pred_check_branch
        %1375 = sbr.rel (%p1373) target = $region60
      $region59: #{tpu_custom_call.1} parent=47 // pred_region
        %s1376 = smul.u32 8, %s23
      $region60: #{tpu_custom_call.1} parent=47 // pred_fallthru
        _
    $region48: #{tpu_custom_call.1} parent=5 // pred_fallthru
      _
    %p1377 = scmp.le.s32.totalorder 2, %s13
    // Predicated region
    $region61: #{tpu_custom_call.1} parent=5 // pred_check
      %p1378 = pneg %p1377
    $region62: #{tpu_custom_call.1} parent=5 // pred_check_branch
      %1380 = sbr.rel (%p1378) target = $region64
    $region63: #{tpu_custom_call.1} parent=5 // pred_region
      %s1381 = ssub.s32 %s13, 2
      // Predicated region
      $region65: #{tpu_custom_call.1} parent=63 // pred_check
        %p1382 = pneg %p208
      $region66: #{tpu_custom_call.1} parent=63 // pred_check_branch
        %1384 = sbr.rel (%p1382) target = $region68
      $region67: #{tpu_custom_call.1} parent=63 // pred_region
        %s1385 = smul.u32 8, %s25
        %p1386 = scmp.lt.s32.totalorder %s24, 1
        %s1387 = scalar_select %p1386, %s24, 1
        %p1388 = scmp.lt.s32.totalorder %s1385, 15
        %s1389 = scalar_select %p1388, %s1385, 15
        %s1390 = smul.addr %s1389, 2
        %s1391 = smul.addr %s1387, 32
        %s1392 = sadd.s32 %s1390, %s1391
        %s1393 = smul.addr %s1392, 8
        %s1394 = scalar_lea.vmem %s7, %s1393
      $region68: #{tpu_custom_call.1} parent=63 // pred_fallthru
        _
    $region64: #{tpu_custom_call.1} parent=5 // pred_fallthru
      _
  $region6: #{tpu_custom_call.1} parent=0 // loop_footer
    %s17 = sadd.s32 1, %s13
  $region7: #{tpu_custom_call.1} parent=0 // loop_footer_branch
    %12 = sbr.rel target = $region3
  $region8: #{tpu_custom_call.1} parent=0 // loop_exit
    _

</llo_original>
